<compile_context>
chip_gen: v5e
topology: v5e:2x2
jax: 0.10.0
libtpu: 0.0.40
codegen_flags: <defaults>
</compile_context>

<pallas_src>
import functools

import jax
import jax.numpy as jnp
from jax import lax
from jax.experimental import pallas as pl
from jax.experimental.pallas import tpu as pltpu

EPS = 1e-5
_OFFSETS = tuple((oy, ox) for oy in (-1, 0, 1) for ox in (-1, 0, 1))


def _round_up(n, m):
    return (n + m - 1) // m * m


def _final_block_kernel(H, W, Cout, CP, COP, PS,
                        xm_ref, wk_ref, pv_ref, o_ref, slab_ref):
    """Whole FinalBlock forward; channels on sublanes, N*H*W on lanes."""
    L = o_ref.shape[1]                     # flattened (n, y, x), lane axis
    inv_l = 1.0 / L

    # input activations (channel-padded to CP rows) and the 9 precomputed
    # tap-validity masks (zero padding) packed in the same DMA.
    x = xm_ref[0:CP, :]                                   # (CP, L)
    masks = [xm_ref[pl.ds(CP + t, 1), :] for t in range(9)]   # each (1, L)

    # Permanent bias stripe: slab row 9*CP is all ones (matches the bias
    # column of every packed conv weight); rows 9*CP+1..+7 are zeros.
    row = lax.broadcasted_iota(jnp.int32, (8, L), 0)
    slab_ref[pl.ds(9 * CP, 8), :] = (row == 0).astype(jnp.float32)

    def conv3x3(h, w):
        # h: (CP, L) channel-padded activations. Build the aligned im2col slab
        # (9 XLU lane rolls + per-lane masks) — every tap stripe is fully
        # overwritten, no zero-fill needed — then one MXU matmul. The conv
        # bias rides in weight column 9*CP against the permanent ones row.
        for t, (oy, ox) in enumerate(_OFFSETS):
            shift = (-(oy * W + ox)) % L
            slab_ref[t * CP:(t + 1) * CP, :] = pltpu.roll(h, shift, 1) * masks[t]
        return jnp.dot(w, slab_ref[...], preferred_element_type=jnp.float32)

    def bn_scale_shift(h, g, be):
        # training-mode BN over (N,H,W) == the lane axis; one-pass stats
        # (clamped), returned in scale/shift form (2 VPU passes at apply time).
        mean = jnp.sum(h, axis=1, keepdims=True) * inv_l
        var = jnp.maximum(
            jnp.sum(h * h, axis=1, keepdims=True) * inv_l - mean * mean, 0.0)
        scale = g * lax.rsqrt(var + EPS)
        shift = be - mean * scale
        return scale, shift

    # per-channel parameters / 1x1 conv weight, all at 8-aligned offsets
    def seg(i, n):
        return pv_ref[pl.ds(i * PS, n), pl.ds(0, 1)]      # (n, 1) column

    g1, be1 = seg(0, CP), seg(1, CP)
    g2, be2 = seg(2, CP), seg(3, CP)
    g3, be3 = seg(4, COP), seg(5, COP)
    b3 = seg(6, COP)
    w3p = pv_ref[pl.ds(7 * PS, COP), :]                   # (COP, CP) 1x1 conv

    # stage 1: skip-conv and conv_1 fused into one matmul over shared patches
    wa = wk_ref[0:CP + COP, :]
    ha = conv3x3(x, wa)                                   # (CP+COP, L)
    h1 = jnp.maximum(ha[:CP, :], 0.0)                     # conv_1 + relu_1
    skip = ha[CP:, :]                                     # (COP, L)
    s1, t1 = bn_scale_shift(h1, g1, be1)
    h = h1 * s1 + t1                                      # bn_1 (padding rows stay 0)

    # stage 2: conv_2 -> relu_2 -> bn_2 (scale/shift form)
    w2 = wk_ref[CP + COP:2 * CP + COP, :]
    z = jnp.maximum(conv3x3(h, w2), 0.0)
    s2, t2 = bn_scale_shift(z, g2, be2)
    h2 = z * s2 + t2

    # stage 3: conv_3 (1x1) -> +skip (+b3) -> relu_3 -> bn_3
    out3 = jnp.dot(w3p, h2, preferred_element_type=jnp.float32)   # (COP, L)
    r = jnp.maximum(out3 + skip + b3, 0.0)
    s3, t3 = bn_scale_shift(r, g3, be3)
    o_ref[...] = (r * s3 + t3)[:Cout, :].astype(o_ref.dtype)


def _pack_conv3x3(w_hwio, bias, cin_pad, cout_pad, kw):
    """(3,3,Cin,Cout) HWIO + (Cout,) bias -> (cout_pad, kw) weight block.

    Columns [t*cin_pad, t*cin_pad+Cin) hold tap t; column 9*cin_pad holds the
    bias (it multiplies the permanent ones row of the slab). Padding rows /
    columns are exactly zero.
    """
    _, _, cin, cout = w_hwio.shape
    wm = jnp.zeros((cout_pad, kw), jnp.float32)
    for ky in range(3):
        for kx in range(3):
            t = ky * 3 + kx
            wm = wm.at[:cout, t * cin_pad:t * cin_pad + cin].set(
                jnp.asarray(w_hwio[ky, kx], jnp.float32).T)
    wm = wm.at[:cout, 9 * cin_pad].set(jnp.asarray(bias, jnp.float32))
    return wm


def final_block_forward(x_nchw, params):
    """x_nchw: (N, Cin, H, W) float32. Returns (N, Cout, H, W)."""
    N, Cin, H, W = x_nchw.shape
    Cmid = params["w1"].shape[-1]
    Cout = params["w_skip"].shape[-1]
    L = N * H * W
    CP = _round_up(max(Cin, Cmid), 8)      # sublane-aligned channel stride
    COP = _round_up(Cout, 8)
    PS = max(CP, COP)                      # per-channel param segment stride
    KW = 9 * CP + 8                        # slab rows (9 taps + bias stripe)

    vec = lambda a: jnp.asarray(a, jnp.float32).reshape(-1)

    # --- input pack: channel-padded x ++ 9 zero-padding masks (1 DMA) -------
    x_cl = jnp.transpose(x_nchw, (1, 0, 2, 3)).reshape(Cin, L).astype(jnp.float32)
    x_cl = jnp.pad(x_cl, ((0, CP - Cin), (0, 0)))
    lane = jnp.arange(L, dtype=jnp.int32)
    xi = lane % W
    yi = (lane // W) % H
    mrows = []
    for oy, ox in _OFFSETS:
        ok = (yi + oy >= 0) & (yi + oy < H) & (xi + ox >= 0) & (xi + ox < W)
        mrows.append(ok.astype(jnp.float32))
    xm = jnp.concatenate([x_cl, jnp.stack(mrows, axis=0)], axis=0)   # (CP+9, L)

    # --- weight pack: fused conv1+skip, then conv2 (1 DMA) ------------------
    wk = jnp.concatenate([
        _pack_conv3x3(params["w1"], vec(params["b1"]), CP, CP, KW),       # conv_1
        _pack_conv3x3(params["w_skip"], vec(params["b_skip"]), CP, COP, KW),  # skip
        _pack_conv3x3(params["w2"], vec(params["b2"]), CP, CP, KW),       # conv_2
    ], axis=0)                                                     # (2CP+COP, KW)

    # --- per-channel params + 1x1 conv weight (1 DMA) -----------------------
    def colseg(a, n):
        v = jnp.zeros((PS, CP), jnp.float32)
        return v.at[:n, 0].set(vec(a))

    w3seg = jnp.zeros((PS, CP), jnp.float32).at[:Cout, :Cmid].set(
        jnp.asarray(params["w3"], jnp.float32).T)
    pv = jnp.concatenate([
        colseg(params["g1"], Cmid), colseg(params["be1"], Cmid),
        colseg(params["g2"], Cmid), colseg(params["be2"], Cmid),
        colseg(params["g3"], Cout), colseg(params["be3"], Cout),
        colseg(params["b3"], Cout), w3seg,
    ], axis=0)                                                     # (8*PS, CP)

    out_cl = pl.pallas_call(
        functools.partial(_final_block_kernel, H, W, Cout, CP, COP, PS),
        out_shape=jax.ShapeDtypeStruct((Cout, L), jnp.float32),
        in_specs=[pl.BlockSpec(memory_space=pltpu.MemorySpace.VMEM)] * 3,
        out_specs=pl.BlockSpec(memory_space=pltpu.MemorySpace.VMEM),
        scratch_shapes=[pltpu.VMEM((KW, L), jnp.float32)],
    )(xm, wk, pv)

    # (Cout, N*H*W) -> NCHW; wrapper-side layout plumbing only
    return out_cl.reshape(Cout, N, H, W).transpose(1, 0, 2, 3)


# ---------------------------------------------------------------------------
# Pure-JAX reference (NHWC, same math) for a correctness sanity check.
# ---------------------------------------------------------------------------
def _ref_forward(x_nchw, p):
    x = jnp.transpose(x_nchw, (0, 2, 3, 1)).astype(jnp.float32)

    def conv(h, w, b):
        return lax.conv_general_dilated(
            h, w, (1, 1), "SAME",
            dimension_numbers=("NHWC", "HWIO", "NHWC")) + b

    def bn(h, g, be):
        m = jnp.mean(h, axis=(0, 1, 2), keepdims=True)
        v = jnp.mean((h - m) ** 2, axis=(0, 1, 2), keepdims=True)
        return (h - m) * (g * lax.rsqrt(v + EPS)) + be

    skip = conv(x, p["w_skip"], p["b_skip"])
    h = bn(jnp.maximum(conv(x, p["w1"], p["b1"]), 0.0), p["g1"], p["be1"])
    h = bn(jnp.maximum(conv(h, p["w2"], p["b2"]), 0.0), p["g2"], p["be2"])
    h = conv(h, p["w3"].reshape(1, 1, *p["w3"].shape), p["b3"])
    out = bn(jnp.maximum(h + skip, 0.0), p["g3"], p["be3"])
    return jnp.transpose(out, (0, 3, 1, 2))


def _make_params(key, cin, cmid, cout):
    ks = jax.random.split(key, 16)
    n = lambda k, s, sc=0.1: (sc * jax.random.normal(k, s)).astype(jnp.float32)
    return {
        "w_skip": n(ks[0], (3, 3, cin, cout)),
        "b_skip": n(ks[1], (1, 1, 1, cout)),
        "w1": n(ks[2], (3, 3, cin, cmid)),
        "b1": n(ks[3], (1, 1, 1, cmid)),
        "g1": 1.0 + n(ks[4], (1, 1, 1, cmid)),
        "be1": n(ks[5], (1, 1, 1, cmid)),
        "w2": n(ks[6], (3, 3, cmid, cmid)),
        "b2": n(ks[7], (1, 1, 1, cmid)),
        "g2": 1.0 + n(ks[8], (1, 1, 1, cmid)),
        "be2": n(ks[9], (1, 1, 1, cmid)),
        "w3": n(ks[10], (cmid, cout)),
        "b3": n(ks[11], (1, 1, 1, cout)),
        "g3": 1.0 + n(ks[12], (1, 1, 1, cout)),
        "be3": n(ks[13], (1, 1, 1, cout)),
    }


if __name__ == "__main__":
    key = jax.random.PRNGKey(0)
    k_x, k_p = jax.random.split(key)

    N, Cin, Cmid, Cout, H, W = 2, 4, 8, 4, 16, 16
    x = jax.random.normal(k_x, (N, Cin, H, W), dtype=jnp.float32)
    params = _make_params(k_p, Cin, Cmid, Cout)

    out = jax.block_until_ready(final_block_forward(x, params))
    ref = jax.block_until_ready(_ref_forward(x, params))

    assert out.shape == (N, Cout, H, W)
    assert jnp.all(jnp.isfinite(out))
    max_err = float(jnp.max(jnp.abs(out - ref)))
    assert jnp.allclose(out, ref, rtol=2e-2, atol=2e-2), max_err
    print("KERNEL_OK")
</pallas_src>

<mosaic_0001>
module attributes {stable_mosaic.version = 11 : i64} {
  func.func @_final_block_kernel(%arg0: memref<17x512xf32, #tpu.memory_space<vmem>>, %arg1: memref<24x80xf32, #tpu.memory_space<vmem>>, %arg2: memref<64x8xf32, #tpu.memory_space<vmem>>, %arg3: memref<4x512xf32, #tpu.memory_space<vmem>>, %arg4: memref<80x512xf32, #tpu.memory_space<vmem>>) attributes {dimension_semantics = [], scalar_prefetch = 0 : i64, scratch_operands = 1 : i64, tpu.core_type = #tpu.core_type<tc>} {
    %c0 = arith.constant 0 : index
    %c0_0 = arith.constant 0 : index
    %0 = vector.load %arg0[%c0, %c0_0] : memref<17x512xf32, #tpu.memory_space<vmem>>, vector<8x512xf32>
    %c8 = arith.constant 8 : index
    %c0_1 = arith.constant 0 : index
    %1 = vector.load %arg0[%c8, %c0_1] : memref<17x512xf32, #tpu.memory_space<vmem>>, vector<1x512xf32>
    %c9 = arith.constant 9 : index
    %c0_2 = arith.constant 0 : index
    %2 = vector.load %arg0[%c9, %c0_2] : memref<17x512xf32, #tpu.memory_space<vmem>>, vector<1x512xf32>
    %c10 = arith.constant 10 : index
    %c0_3 = arith.constant 0 : index
    %3 = vector.load %arg0[%c10, %c0_3] : memref<17x512xf32, #tpu.memory_space<vmem>>, vector<1x512xf32>
    %c11 = arith.constant 11 : index
    %c0_4 = arith.constant 0 : index
    %4 = vector.load %arg0[%c11, %c0_4] : memref<17x512xf32, #tpu.memory_space<vmem>>, vector<1x512xf32>
    %c12 = arith.constant 12 : index
    %c0_5 = arith.constant 0 : index
    %5 = vector.load %arg0[%c12, %c0_5] : memref<17x512xf32, #tpu.memory_space<vmem>>, vector<1x512xf32>
    %c13 = arith.constant 13 : index
    %c0_6 = arith.constant 0 : index
    %6 = vector.load %arg0[%c13, %c0_6] : memref<17x512xf32, #tpu.memory_space<vmem>>, vector<1x512xf32>
    %c14 = arith.constant 14 : index
    %c0_7 = arith.constant 0 : index
    %7 = vector.load %arg0[%c14, %c0_7] : memref<17x512xf32, #tpu.memory_space<vmem>>, vector<1x512xf32>
    %c15 = arith.constant 15 : index
    %c0_8 = arith.constant 0 : index
    %8 = vector.load %arg0[%c15, %c0_8] : memref<17x512xf32, #tpu.memory_space<vmem>>, vector<1x512xf32>
    %c16 = arith.constant 16 : index
    %c0_9 = arith.constant 0 : index
    %9 = vector.load %arg0[%c16, %c0_9] : memref<17x512xf32, #tpu.memory_space<vmem>>, vector<1x512xf32>
    %10 = tpu.iota {dimensions = array<i32: 0>} : vector<8x512xi32>
    %c0_i32 = arith.constant 0 : i32
    %11 = vector.broadcast %c0_i32 : i32 to vector<8x512xi32>
    %12 = arith.cmpi eq, %10, %11 : vector<8x512xi32>
    %13 = arith.extui %12 : vector<8x512xi1> to vector<8x512xi32>
    %14 = arith.sitofp %13 : vector<8x512xi32> to vector<8x512xf32>
    %c72 = arith.constant 72 : index
    %c0_10 = arith.constant 0 : index
    %15 = vector.load %arg4[%c72, %c0_10] : memref<80x512xf32, #tpu.memory_space<vmem>>, vector<8x512xf32>
    tpu.vector_store %arg4[%c72, %c0_10], %14 {strides = array<i32>} : memref<80x512xf32, #tpu.memory_space<vmem>>, vector<8x512xf32>,
    %c0_11 = arith.constant 0 : index
    %c0_12 = arith.constant 0 : index
    %16 = vector.load %arg2[%c0_11, %c0_12] : memref<64x8xf32, #tpu.memory_space<vmem>>, vector<8x1xf32>
    %c8_13 = arith.constant 8 : index
    %c0_14 = arith.constant 0 : index
    %17 = vector.load %arg2[%c8_13, %c0_14] : memref<64x8xf32, #tpu.memory_space<vmem>>, vector<8x1xf32>
    %c16_15 = arith.constant 16 : index
    %c0_16 = arith.constant 0 : index
    %18 = vector.load %arg2[%c16_15, %c0_16] : memref<64x8xf32, #tpu.memory_space<vmem>>, vector<8x1xf32>
    %c24 = arith.constant 24 : index
    %c0_17 = arith.constant 0 : index
    %19 = vector.load %arg2[%c24, %c0_17] : memref<64x8xf32, #tpu.memory_space<vmem>>, vector<8x1xf32>
    %c32 = arith.constant 32 : index
    %c0_18 = arith.constant 0 : index
    %20 = vector.load %arg2[%c32, %c0_18] : memref<64x8xf32, #tpu.memory_space<vmem>>, vector<8x1xf32>
    %c40 = arith.constant 40 : index
    %c0_19 = arith.constant 0 : index
    %21 = vector.load %arg2[%c40, %c0_19] : memref<64x8xf32, #tpu.memory_space<vmem>>, vector<8x1xf32>
    %c48 = arith.constant 48 : index
    %c0_20 = arith.constant 0 : index
    %22 = vector.load %arg2[%c48, %c0_20] : memref<64x8xf32, #tpu.memory_space<vmem>>, vector<8x1xf32>
    %c56 = arith.constant 56 : index
    %c0_21 = arith.constant 0 : index
    %23 = vector.load %arg2[%c56, %c0_21] : memref<64x8xf32, #tpu.memory_space<vmem>>, vector<8x8xf32>
    %c0_22 = arith.constant 0 : index
    %c0_23 = arith.constant 0 : index
    %24 = vector.load %arg1[%c0_22, %c0_23] : memref<24x80xf32, #tpu.memory_space<vmem>>, vector<16x80xf32>
    %c17_i32 = arith.constant 17 : i32
    %25 = tpu.dynamic_rotate %0 by %c17_i32 dim 1 : vector<8x512xf32>, i32 -> vector<8x512xf32>
    %26 = vector.broadcast %1 : vector<1x512xf32> to vector<8x512xf32>
    %27 = arith.mulf %25, %26 : vector<8x512xf32>
    %c0_24 = arith.constant 0 : index
    %c0_25 = arith.constant 0 : index
    %28 = vector.load %arg4[%c0_24, %c0_25] : memref<80x512xf32, #tpu.memory_space<vmem>>, vector<8x512xf32>
    tpu.vector_store %arg4[%c0_24, %c0_25], %27 {strides = array<i32>} : memref<80x512xf32, #tpu.memory_space<vmem>>, vector<8x512xf32>,
    %c16_i32 = arith.constant 16 : i32
    %29 = tpu.dynamic_rotate %0 by %c16_i32 dim 1 : vector<8x512xf32>, i32 -> vector<8x512xf32>
    %30 = vector.broadcast %2 : vector<1x512xf32> to vector<8x512xf32>
    %31 = arith.mulf %29, %30 : vector<8x512xf32>
    %c8_26 = arith.constant 8 : index
    %c0_27 = arith.constant 0 : index
    %32 = vector.load %arg4[%c8_26, %c0_27] : memref<80x512xf32, #tpu.memory_space<vmem>>, vector<8x512xf32>
    tpu.vector_store %arg4[%c8_26, %c0_27], %31 {strides = array<i32>} : memref<80x512xf32, #tpu.memory_space<vmem>>, vector<8x512xf32>,
    %c15_i32 = arith.constant 15 : i32
    %33 = tpu.dynamic_rotate %0 by %c15_i32 dim 1 : vector<8x512xf32>, i32 -> vector<8x512xf32>
    %34 = vector.broadcast %3 : vector<1x512xf32> to vector<8x512xf32>
    %35 = arith.mulf %33, %34 : vector<8x512xf32>
    %c16_28 = arith.constant 16 : index
    %c0_29 = arith.constant 0 : index
    %36 = vector.load %arg4[%c16_28, %c0_29] : memref<80x512xf32, #tpu.memory_space<vmem>>, vector<8x512xf32>
    tpu.vector_store %arg4[%c16_28, %c0_29], %35 {strides = array<i32>} : memref<80x512xf32, #tpu.memory_space<vmem>>, vector<8x512xf32>,
    %c1_i32 = arith.constant 1 : i32
    %37 = tpu.dynamic_rotate %0 by %c1_i32 dim 1 : vector<8x512xf32>, i32 -> vector<8x512xf32>
    %38 = vector.broadcast %4 : vector<1x512xf32> to vector<8x512xf32>
    %39 = arith.mulf %37, %38 : vector<8x512xf32>
    %c24_30 = arith.constant 24 : index
    %c0_31 = arith.constant 0 : index
    %40 = vector.load %arg4[%c24_30, %c0_31] : memref<80x512xf32, #tpu.memory_space<vmem>>, vector<8x512xf32>
    tpu.vector_store %arg4[%c24_30, %c0_31], %39 {strides = array<i32>} : memref<80x512xf32, #tpu.memory_space<vmem>>, vector<8x512xf32>,
    %c0_i32_32 = arith.constant 0 : i32
    %41 = tpu.dynamic_rotate %0 by %c0_i32_32 dim 1 : vector<8x512xf32>, i32 -> vector<8x512xf32>
    %42 = vector.broadcast %5 : vector<1x512xf32> to vector<8x512xf32>
    %43 = arith.mulf %41, %42 : vector<8x512xf32>
    %c32_33 = arith.constant 32 : index
    %c0_34 = arith.constant 0 : index
    %44 = vector.load %arg4[%c32_33, %c0_34] : memref<80x512xf32, #tpu.memory_space<vmem>>, vector<8x512xf32>
    tpu.vector_store %arg4[%c32_33, %c0_34], %43 {strides = array<i32>} : memref<80x512xf32, #tpu.memory_space<vmem>>, vector<8x512xf32>,
    %c511_i32 = arith.constant 511 : i32
    %45 = tpu.dynamic_rotate %0 by %c511_i32 dim 1 : vector<8x512xf32>, i32 -> vector<8x512xf32>
    %46 = vector.broadcast %6 : vector<1x512xf32> to vector<8x512xf32>
    %47 = arith.mulf %45, %46 : vector<8x512xf32>
    %c40_35 = arith.constant 40 : index
    %c0_36 = arith.constant 0 : index
    %48 = vector.load %arg4[%c40_35, %c0_36] : memref<80x512xf32, #tpu.memory_space<vmem>>, vector<8x512xf32>
    tpu.vector_store %arg4[%c40_35, %c0_36], %47 {strides = array<i32>} : memref<80x512xf32, #tpu.memory_space<vmem>>, vector<8x512xf32>,
    %c497_i32 = arith.constant 497 : i32
    %49 = tpu.dynamic_rotate %0 by %c497_i32 dim 1 : vector<8x512xf32>, i32 -> vector<8x512xf32>
    %50 = vector.broadcast %7 : vector<1x512xf32> to vector<8x512xf32>
    %51 = arith.mulf %49, %50 : vector<8x512xf32>
    %c48_37 = arith.constant 48 : index
    %c0_38 = arith.constant 0 : index
    %52 = vector.load %arg4[%c48_37, %c0_38] : memref<80x512xf32, #tpu.memory_space<vmem>>, vector<8x512xf32>
    tpu.vector_store %arg4[%c48_37, %c0_38], %51 {strides = array<i32>} : memref<80x512xf32, #tpu.memory_space<vmem>>, vector<8x512xf32>,
    %c496_i32 = arith.constant 496 : i32
    %53 = tpu.dynamic_rotate %0 by %c496_i32 dim 1 : vector<8x512xf32>, i32 -> vector<8x512xf32>
    %54 = vector.broadcast %8 : vector<1x512xf32> to vector<8x512xf32>
    %55 = arith.mulf %53, %54 : vector<8x512xf32>
    %c56_39 = arith.constant 56 : index
    %c0_40 = arith.constant 0 : index
    %56 = vector.load %arg4[%c56_39, %c0_40] : memref<80x512xf32, #tpu.memory_space<vmem>>, vector<8x512xf32>
    tpu.vector_store %arg4[%c56_39, %c0_40], %55 {strides = array<i32>} : memref<80x512xf32, #tpu.memory_space<vmem>>, vector<8x512xf32>,
    %c495_i32 = arith.constant 495 : i32
    %57 = tpu.dynamic_rotate %0 by %c495_i32 dim 1 : vector<8x512xf32>, i32 -> vector<8x512xf32>
    %58 = vector.broadcast %9 : vector<1x512xf32> to vector<8x512xf32>
    %59 = arith.mulf %57, %58 : vector<8x512xf32>
    %c64 = arith.constant 64 : index
    %c0_41 = arith.constant 0 : index
    %60 = vector.load %arg4[%c64, %c0_41] : memref<80x512xf32, #tpu.memory_space<vmem>>, vector<8x512xf32>
    tpu.vector_store %arg4[%c64, %c0_41], %59 {strides = array<i32>} : memref<80x512xf32, #tpu.memory_space<vmem>>, vector<8x512xf32>,
    %c0_42 = arith.constant 0 : index
    %c0_43 = arith.constant 0 : index
    %61 = vector.load %arg4[%c0_42, %c0_43] : memref<80x512xf32, #tpu.memory_space<vmem>>, vector<80x512xf32>
    %cst = arith.constant dense<0.000000e+00> : vector<16x512xf32>
    %62 = tpu.matmul %24, %61, %cst {dimension_numbers = #tpu.dot_dimension_numbers<[1], [0], [0], [1], [0, 0, 1, 1], [], []>} : vector<16x80xf32>, vector<80x512xf32>, vector<16x512xf32> -> vector<16x512xf32>
    %63 = vector.extract_strided_slice %62 {offsets = [0, 0], sizes = [8, 512], strides = [1, 1]} : vector<16x512xf32> to vector<8x512xf32>
    %cst_44 = arith.constant 0.000000e+00 : f32
    %64 = vector.broadcast %cst_44 : f32 to vector<8x512xf32>
    %65 = arith.maximumf %63, %64 : vector<8x512xf32>
    %66 = vector.extract_strided_slice %62 {offsets = [8, 0], sizes = [8, 512], strides = [1, 1]} : vector<16x512xf32> to vector<8x512xf32>
    %cst_45 = arith.constant dense<0.000000e+00> : vector<8xf32>
    %67 = vector.multi_reduction <add>, %65, %cst_45 [1] : vector<8x512xf32> to vector<8xf32>
    %68 = vector.shape_cast %67 : vector<8xf32> to vector<8x1xf32>
    %cst_46 = arith.constant 0.001953125 : f32
    %69 = vector.broadcast %cst_46 : f32 to vector<8x1xf32>
    %70 = arith.mulf %68, %69 : vector<8x1xf32>
    %71 = arith.mulf %65, %65 : vector<8x512xf32>
    %cst_47 = arith.constant dense<0.000000e+00> : vector<8xf32>
    %72 = vector.multi_reduction <add>, %71, %cst_47 [1] : vector<8x512xf32> to vector<8xf32>
    %73 = vector.shape_cast %72 : vector<8xf32> to vector<8x1xf32>
    %cst_48 = arith.constant 0.001953125 : f32
    %74 = vector.broadcast %cst_48 : f32 to vector<8x1xf32>
    %75 = arith.mulf %73, %74 : vector<8x1xf32>
    %76 = arith.mulf %70, %70 : vector<8x1xf32>
    %77 = arith.subf %75, %76 : vector<8x1xf32>
    %cst_49 = arith.constant 0.000000e+00 : f32
    %78 = vector.broadcast %cst_49 : f32 to vector<8x1xf32>
    %79 = arith.maximumf %77, %78 : vector<8x1xf32>
    %cst_50 = arith.constant 9.99999974E-6 : f32
    %80 = vector.broadcast %cst_50 : f32 to vector<8x1xf32>
    %81 = arith.addf %79, %80 : vector<8x1xf32>
    %82 = math.rsqrt %81 : vector<8x1xf32>
    %83 = arith.mulf %16, %82 : vector<8x1xf32>
    %84 = arith.mulf %70, %83 : vector<8x1xf32>
    %85 = arith.subf %17, %84 : vector<8x1xf32>
    %86 = vector.broadcast %83 : vector<8x1xf32> to vector<8x512xf32>
    %87 = arith.mulf %65, %86 : vector<8x512xf32>
    %88 = vector.broadcast %85 : vector<8x1xf32> to vector<8x512xf32>
    %89 = arith.addf %87, %88 : vector<8x512xf32>
    %c16_51 = arith.constant 16 : index
    %c0_52 = arith.constant 0 : index
    %90 = vector.load %arg1[%c16_51, %c0_52] : memref<24x80xf32, #tpu.memory_space<vmem>>, vector<8x80xf32>
    %c17_i32_53 = arith.constant 17 : i32
    %91 = tpu.dynamic_rotate %89 by %c17_i32_53 dim 1 : vector<8x512xf32>, i32 -> vector<8x512xf32>
    %92 = vector.broadcast %1 : vector<1x512xf32> to vector<8x512xf32>
    %93 = arith.mulf %91, %92 : vector<8x512xf32>
    %c0_54 = arith.constant 0 : index
    %c0_55 = arith.constant 0 : index
    %94 = vector.load %arg4[%c0_54, %c0_55] : memref<80x512xf32, #tpu.memory_space<vmem>>, vector<8x512xf32>
    tpu.vector_store %arg4[%c0_54, %c0_55], %93 {strides = array<i32>} : memref<80x512xf32, #tpu.memory_space<vmem>>, vector<8x512xf32>,
    %c16_i32_56 = arith.constant 16 : i32
    %95 = tpu.dynamic_rotate %89 by %c16_i32_56 dim 1 : vector<8x512xf32>, i32 -> vector<8x512xf32>
    %96 = vector.broadcast %2 : vector<1x512xf32> to vector<8x512xf32>
    %97 = arith.mulf %95, %96 : vector<8x512xf32>
    %c8_57 = arith.constant 8 : index
    %c0_58 = arith.constant 0 : index
    %98 = vector.load %arg4[%c8_57, %c0_58] : memref<80x512xf32, #tpu.memory_space<vmem>>, vector<8x512xf32>
    tpu.vector_store %arg4[%c8_57, %c0_58], %97 {strides = array<i32>} : memref<80x512xf32, #tpu.memory_space<vmem>>, vector<8x512xf32>,
    %c15_i32_59 = arith.constant 15 : i32
    %99 = tpu.dynamic_rotate %89 by %c15_i32_59 dim 1 : vector<8x512xf32>, i32 -> vector<8x512xf32>
    %100 = vector.broadcast %3 : vector<1x512xf32> to vector<8x512xf32>
    %101 = arith.mulf %99, %100 : vector<8x512xf32>
    %c16_60 = arith.constant 16 : index
    %c0_61 = arith.constant 0 : index
    %102 = vector.load %arg4[%c16_60, %c0_61] : memref<80x512xf32, #tpu.memory_space<vmem>>, vector<8x512xf32>
    tpu.vector_store %arg4[%c16_60, %c0_61], %101 {strides = array<i32>} : memref<80x512xf32, #tpu.memory_space<vmem>>, vector<8x512xf32>,
    %c1_i32_62 = arith.constant 1 : i32
    %103 = tpu.dynamic_rotate %89 by %c1_i32_62 dim 1 : vector<8x512xf32>, i32 -> vector<8x512xf32>
    %104 = vector.broadcast %4 : vector<1x512xf32> to vector<8x512xf32>
    %105 = arith.mulf %103, %104 : vector<8x512xf32>
    %c24_63 = arith.constant 24 : index
    %c0_64 = arith.constant 0 : index
    %106 = vector.load %arg4[%c24_63, %c0_64] : memref<80x512xf32, #tpu.memory_space<vmem>>, vector<8x512xf32>
    tpu.vector_store %arg4[%c24_63, %c0_64], %105 {strides = array<i32>} : memref<80x512xf32, #tpu.memory_space<vmem>>, vector<8x512xf32>,
    %c0_i32_65 = arith.constant 0 : i32
    %107 = tpu.dynamic_rotate %89 by %c0_i32_65 dim 1 : vector<8x512xf32>, i32 -> vector<8x512xf32>
    %108 = vector.broadcast %5 : vector<1x512xf32> to vector<8x512xf32>
    %109 = arith.mulf %107, %108 : vector<8x512xf32>
    %c32_66 = arith.constant 32 : index
    %c0_67 = arith.constant 0 : index
    %110 = vector.load %arg4[%c32_66, %c0_67] : memref<80x512xf32, #tpu.memory_space<vmem>>, vector<8x512xf32>
    tpu.vector_store %arg4[%c32_66, %c0_67], %109 {strides = array<i32>} : memref<80x512xf32, #tpu.memory_space<vmem>>, vector<8x512xf32>,
    %c511_i32_68 = arith.constant 511 : i32
    %111 = tpu.dynamic_rotate %89 by %c511_i32_68 dim 1 : vector<8x512xf32>, i32 -> vector<8x512xf32>
    %112 = vector.broadcast %6 : vector<1x512xf32> to vector<8x512xf32>
    %113 = arith.mulf %111, %112 : vector<8x512xf32>
    %c40_69 = arith.constant 40 : index
    %c0_70 = arith.constant 0 : index
    %114 = vector.load %arg4[%c40_69, %c0_70] : memref<80x512xf32, #tpu.memory_space<vmem>>, vector<8x512xf32>
    tpu.vector_store %arg4[%c40_69, %c0_70], %113 {strides = array<i32>} : memref<80x512xf32, #tpu.memory_space<vmem>>, vector<8x512xf32>,
    %c497_i32_71 = arith.constant 497 : i32
    %115 = tpu.dynamic_rotate %89 by %c497_i32_71 dim 1 : vector<8x512xf32>, i32 -> vector<8x512xf32>
    %116 = vector.broadcast %7 : vector<1x512xf32> to vector<8x512xf32>
    %117 = arith.mulf %115, %116 : vector<8x512xf32>
    %c48_72 = arith.constant 48 : index
    %c0_73 = arith.constant 0 : index
    %118 = vector.load %arg4[%c48_72, %c0_73] : memref<80x512xf32, #tpu.memory_space<vmem>>, vector<8x512xf32>
    tpu.vector_store %arg4[%c48_72, %c0_73], %117 {strides = array<i32>} : memref<80x512xf32, #tpu.memory_space<vmem>>, vector<8x512xf32>,
    %c496_i32_74 = arith.constant 496 : i32
    %119 = tpu.dynamic_rotate %89 by %c496_i32_74 dim 1 : vector<8x512xf32>, i32 -> vector<8x512xf32>
    %120 = vector.broadcast %8 : vector<1x512xf32> to vector<8x512xf32>
    %121 = arith.mulf %119, %120 : vector<8x512xf32>
    %c56_75 = arith.constant 56 : index
    %c0_76 = arith.constant 0 : index
    %122 = vector.load %arg4[%c56_75, %c0_76] : memref<80x512xf32, #tpu.memory_space<vmem>>, vector<8x512xf32>
    tpu.vector_store %arg4[%c56_75, %c0_76], %121 {strides = array<i32>} : memref<80x512xf32, #tpu.memory_space<vmem>>, vector<8x512xf32>,
    %c495_i32_77 = arith.constant 495 : i32
    %123 = tpu.dynamic_rotate %89 by %c495_i32_77 dim 1 : vector<8x512xf32>, i32 -> vector<8x512xf32>
    %124 = vector.broadcast %9 : vector<1x512xf32> to vector<8x512xf32>
    %125 = arith.mulf %123, %124 : vector<8x512xf32>
    %c64_78 = arith.constant 64 : index
    %c0_79 = arith.constant 0 : index
    %126 = vector.load %arg4[%c64_78, %c0_79] : memref<80x512xf32, #tpu.memory_space<vmem>>, vector<8x512xf32>
    tpu.vector_store %arg4[%c64_78, %c0_79], %125 {strides = array<i32>} : memref<80x512xf32, #tpu.memory_space<vmem>>, vector<8x512xf32>,
    %c0_80 = arith.constant 0 : index
    %c0_81 = arith.constant 0 : index
    %127 = vector.load %arg4[%c0_80, %c0_81] : memref<80x512xf32, #tpu.memory_space<vmem>>, vector<80x512xf32>
    %cst_82 = arith.constant dense<0.000000e+00> : vector<8x512xf32>
    %128 = tpu.matmul %90, %127, %cst_82 {dimension_numbers = #tpu.dot_dimension_numbers<[1], [0], [0], [1], [0, 0, 1, 1], [], []>} : vector<8x80xf32>, vector<80x512xf32>, vector<8x512xf32> -> vector<8x512xf32>
    %cst_83 = arith.constant 0.000000e+00 : f32
    %129 = vector.broadcast %cst_83 : f32 to vector<8x512xf32>
    %130 = arith.maximumf %128, %129 : vector<8x512xf32>
    %cst_84 = arith.constant dense<0.000000e+00> : vector<8xf32>
    %131 = vector.multi_reduction <add>, %130, %cst_84 [1] : vector<8x512xf32> to vector<8xf32>
    %132 = vector.shape_cast %131 : vector<8xf32> to vector<8x1xf32>
    %cst_85 = arith.constant 0.001953125 : f32
    %133 = vector.broadcast %cst_85 : f32 to vector<8x1xf32>
    %134 = arith.mulf %132, %133 : vector<8x1xf32>
    %135 = arith.mulf %130, %130 : vector<8x512xf32>
    %cst_86 = arith.constant dense<0.000000e+00> : vector<8xf32>
    %136 = vector.multi_reduction <add>, %135, %cst_86 [1] : vector<8x512xf32> to vector<8xf32>
    %137 = vector.shape_cast %136 : vector<8xf32> to vector<8x1xf32>
    %cst_87 = arith.constant 0.001953125 : f32
    %138 = vector.broadcast %cst_87 : f32 to vector<8x1xf32>
    %139 = arith.mulf %137, %138 : vector<8x1xf32>
    %140 = arith.mulf %134, %134 : vector<8x1xf32>
    %141 = arith.subf %139, %140 : vector<8x1xf32>
    %cst_88 = arith.constant 0.000000e+00 : f32
    %142 = vector.broadcast %cst_88 : f32 to vector<8x1xf32>
    %143 = arith.maximumf %141, %142 : vector<8x1xf32>
    %cst_89 = arith.constant 9.99999974E-6 : f32
    %144 = vector.broadcast %cst_89 : f32 to vector<8x1xf32>
    %145 = arith.addf %143, %144 : vector<8x1xf32>
    %146 = math.rsqrt %145 : vector<8x1xf32>
    %147 = arith.mulf %18, %146 : vector<8x1xf32>
    %148 = arith.mulf %134, %147 : vector<8x1xf32>
    %149 = arith.subf %19, %148 : vector<8x1xf32>
    %150 = vector.broadcast %147 : vector<8x1xf32> to vector<8x512xf32>
    %151 = arith.mulf %130, %150 : vector<8x512xf32>
    %152 = vector.broadcast %149 : vector<8x1xf32> to vector<8x512xf32>
    %153 = arith.addf %151, %152 : vector<8x512xf32>
    %cst_90 = arith.constant dense<0.000000e+00> : vector<8x512xf32>
    %154 = tpu.matmul %23, %153, %cst_90 {dimension_numbers = #tpu.dot_dimension_numbers<[1], [0], [0], [1], [0, 0, 1, 1], [], []>} : vector<8x8xf32>, vector<8x512xf32>, vector<8x512xf32> -> vector<8x512xf32>
    %155 = arith.addf %154, %66 : vector<8x512xf32>
    %156 = vector.broadcast %22 : vector<8x1xf32> to vector<8x512xf32>
    %157 = arith.addf %155, %156 : vector<8x512xf32>
    %cst_91 = arith.constant 0.000000e+00 : f32
    %158 = vector.broadcast %cst_91 : f32 to vector<8x512xf32>
    %159 = arith.maximumf %157, %158 : vector<8x512xf32>
    %cst_92 = arith.constant dense<0.000000e+00> : vector<8xf32>
    %160 = vector.multi_reduction <add>, %159, %cst_92 [1] : vector<8x512xf32> to vector<8xf32>
    %161 = vector.shape_cast %160 : vector<8xf32> to vector<8x1xf32>
    %cst_93 = arith.constant 0.001953125 : f32
    %162 = vector.broadcast %cst_93 : f32 to vector<8x1xf32>
    %163 = arith.mulf %161, %162 : vector<8x1xf32>
    %164 = arith.mulf %159, %159 : vector<8x512xf32>
    %cst_94 = arith.constant dense<0.000000e+00> : vector<8xf32>
    %165 = vector.multi_reduction <add>, %164, %cst_94 [1] : vector<8x512xf32> to vector<8xf32>
    %166 = vector.shape_cast %165 : vector<8xf32> to vector<8x1xf32>
    %cst_95 = arith.constant 0.001953125 : f32
    %167 = vector.broadcast %cst_95 : f32 to vector<8x1xf32>
    %168 = arith.mulf %166, %167 : vector<8x1xf32>
    %169 = arith.mulf %163, %163 : vector<8x1xf32>
    %170 = arith.subf %168, %169 : vector<8x1xf32>
    %cst_96 = arith.constant 0.000000e+00 : f32
    %171 = vector.broadcast %cst_96 : f32 to vector<8x1xf32>
    %172 = arith.maximumf %170, %171 : vector<8x1xf32>
    %cst_97 = arith.constant 9.99999974E-6 : f32
    %173 = vector.broadcast %cst_97 : f32 to vector<8x1xf32>
    %174 = arith.addf %172, %173 : vector<8x1xf32>
    %175 = math.rsqrt %174 : vector<8x1xf32>
    %176 = arith.mulf %20, %175 : vector<8x1xf32>
    %177 = arith.mulf %163, %176 : vector<8x1xf32>
    %178 = arith.subf %21, %177 : vector<8x1xf32>
    %179 = vector.broadcast %176 : vector<8x1xf32> to vector<8x512xf32>
    %180 = arith.mulf %159, %179 : vector<8x512xf32>
    %181 = vector.broadcast %178 : vector<8x1xf32> to vector<8x512xf32>
    %182 = arith.addf %180, %181 : vector<8x512xf32>
    %183 = vector.extract_strided_slice %182 {offsets = [0, 0], sizes = [4, 512], strides = [1, 1]} : vector<8x512xf32> to vector<4x512xf32>
    %c0_98 = arith.constant 0 : index
    %c0_99 = arith.constant 0 : index
    %184 = vector.load %arg3[%c0_98, %c0_99] : memref<4x512xf32, #tpu.memory_space<vmem>>, vector<4x512xf32>
    tpu.vector_store %arg3[%c0_98, %c0_99], %183 {strides = array<i32>} : memref<4x512xf32, #tpu.memory_space<vmem>>, vector<4x512xf32>,
    return
  }
}

</mosaic_0001>

<llo_original>
// kernel: tpu_custom_call.1
$region0: #{tpu_custom_call.1}
  #allocation0 [shape = 'u32[]', space=smem, size = 0x4, offset = 0x4, fixed_abs, tag = 'smem constant byte address 0x4 - core index']
  #allocation1 [shape = 'u32[72,128]{1,0:T(1,128)}', space=vmem, size = 0x9000, scoped, tag = 'internal scratch']
  #allocation2 [shape = 'f32[80,512]{1,0:T(8,128)}', space=vmem, size = 0x28000, scoped, tag = 'scratch operand']
  %s0 = inlined_call_operand.hbm [shape: f32[17,512], index: 0, kind: input, shape index: {}]
  %s1 = inlined_call_operand.vmem [shape: f32[24,80], index: 1, kind: input, shape index: {}]
  %s2 = inlined_call_operand.vmem [shape: f32[64,8], index: 2, kind: input, shape index: {}]
  %s3 = inlined_call_operand.hbm [shape: f32[4,512], index: 3, kind: output, shape index: {}]
  %s4 = sld [smem:[#allocation0]]
  $region26: #{tpu_custom_call.1} parent=0
    _
  %s6 = ssub.s32 1, %s4
  %s7 = scalar_select 0, %s6, %s4
  $region1: #{tpu_custom_call.1} parent=0
    #allocation3 [shape = 'u8[49152]{0}', space=vmem, size = 0xc000, scoped, tag = 'input window, operand 0, single buffered']
    #allocation4 [shape = 's32[1]{0}', space=sflag, size = 0x4, scoped, tag = 'scoped memory for tpu_custom_call.1']
    #allocation5 [shape = 's32[1]{0}', space=sflag, size = 0x4, scoped, tag = 'scoped memory for tpu_custom_call.1']
    #allocation6 [shape = 'u8[8192]{0}', space=vmem, size = 0x2000, scoped, tag = 'output window, operand 0, single buffered']
    %8 = vsyncpa [#allocation4], 0
    %9 = vsyncpa [#allocation5], 0
    // Predicated region
    $region2: #{tpu_custom_call.1} parent=1 // pred_check
      _
    $region3: #{tpu_custom_call.1} parent=1 // pred_check_branch
      %11 = sbr.rel (0) target = $region5
    $region4: #{tpu_custom_call.1} parent=1 // pred_region
      %13 = vsyncadd [#allocation4], 0
      %s14 = sshll.u32 %s0, 4
      %s15 = int_to_ptr.hbm [resolvable:$true] %s14
      %s16 = sshll.u32 [#allocation3], 4
      %s17 = int_to_ptr.vmem [resolvable:$true] %s16
      %22 = dma.hbm_to_vmem [thread:$0]  %s15, 1536, %s17, [#allocation4], 512, 512, 32
    $region5: #{tpu_custom_call.1} parent=1 // pred_fallthru
      _
    // Predicated region
    $region6: #{tpu_custom_call.1} parent=1 // pred_check
      _
    $region7: #{tpu_custom_call.1} parent=1 // pred_check_branch
      %24 = sbr.rel (0) target = $region9
    $region8: #{tpu_custom_call.1} parent=1 // pred_region
      _
    $region9: #{tpu_custom_call.1} parent=1 // pred_fallthru
      _
    // Predicated region
    $region10: #{tpu_custom_call.1} parent=1 // pred_check
      _
    $region11: #{tpu_custom_call.1} parent=1 // pred_check_branch
      %26 = sbr.rel (0) target = $region13
    $region12: #{tpu_custom_call.1} parent=1 // pred_region
      _
    $region13: #{tpu_custom_call.1} parent=1 // pred_fallthru
      _
    // Predicated region
    $region14: #{tpu_custom_call.1} parent=1 // pred_check
      _
    $region15: #{tpu_custom_call.1} parent=1 // pred_check_branch
      %28 = sbr.rel (0) target = $region17
    $region16: #{tpu_custom_call.1} parent=1 // pred_region
      %30 = dma.done [#allocation4], 1536
    $region17: #{tpu_custom_call.1} parent=1 // pred_fallthru
      _
    %v31 = vld [vmem:[#allocation3] sm:$0xff]
    %v32 = vld [vmem:[#allocation3 + $0x8] sm:$0xff]
    %v33 = vld [vmem:[#allocation3 + $0x10] sm:$0xff]
    %v34 = vld [vmem:[#allocation3 + $0x18] sm:$0xff]
    %s35 = scalar_lea.vmem [#allocation3], 32
    %v36 = vld [vmem:[%s35] ss:$8 sm:$0xf]
    %s37 = scalar_lea.vmem [#allocation3], 33
    %v38 = vld [vmem:[%s37] ss:$8 sm:$0xf]
    %s39 = scalar_lea.vmem [#allocation3], 34
    %v40 = vld [vmem:[%s39] ss:$8 sm:$0xf]
    %s41 = scalar_lea.vmem [#allocation3], 35
    %v42 = vld [vmem:[%s41] ss:$8 sm:$0xf]
    %s43 = scalar_lea.vmem [#allocation3], 36
    %v44 = vld [vmem:[%s43] ss:$8 sm:$0xf]
    %s45 = scalar_lea.vmem [#allocation3], 37
    %v46 = vld [vmem:[%s45] ss:$8 sm:$0xf]
    %s47 = scalar_lea.vmem [#allocation3], 38
    %v48 = vld [vmem:[%s47] ss:$8 sm:$0xf]
    %s49 = scalar_lea.vmem [#allocation3], 39
    %v50 = vld [vmem:[%s49] ss:$8 sm:$0xf]
    %s51 = scalar_lea.vmem [#allocation3], 64
    %v52 = vld [vmem:[%s51] ss:$8 sm:$0xf]
    %v53 = vlaneseq
    %v54 = vshrl.u32 %v53, 7
    %vm55 = vcmp.eq.s32.totalorder %v54, 0
    %v56 = vsel %vm55, 1, 0
    %v57 = vcvt.s32.f32 %v56
    %58 = vst [vmem:[#allocation2 + $0x120] sm:$0xff] %v57
    %59 = vst [vmem:[#allocation2 + $0x128] sm:$0xff] %v57
    %60 = vst [vmem:[#allocation2 + $0x130] sm:$0xff] %v57
    %61 = vst [vmem:[#allocation2 + $0x138] sm:$0xff] %v57
    %v62 = vld [vmem:[%s2] sm:$0xff]
    %v63 = vld [vmem:[%s2 + $0x8] sm:$0xff]
    %v64 = vld [vmem:[%s2 + $0x10] sm:$0xff]
    %v65 = vld [vmem:[%s2 + $0x18] sm:$0xff]
    %v66 = vld [vmem:[%s2 + $0x20] sm:$0xff]
    %v67 = vld [vmem:[%s2 + $0x28] sm:$0xff]
    %v68 = vld [vmem:[%s2 + $0x30] sm:$0xff]
    %v69 = vld [vmem:[%s2 + $0x38] sm:$0xff]
    %v70 = vld [vmem:[%s1] sm:$0xff]
    %v71 = vld [vmem:[%s1 + $0x8] sm:$0xff]
    %72 = vrot.lane.b32.xlu0 %v31, 17
    %v73 = vpop.permute.xlu0 %72
    %74 = vrot.lane.b32.xlu0 %v32, 17
    %v75 = vpop.permute.xlu0 %74
    %76 = vrot.lane.b32.xlu0 %v33, 17
    %v77 = vpop.permute.xlu0 %76
    %78 = vrot.lane.b32.xlu0 %v34, 17
    %v79 = vpop.permute.xlu0 %78
    %v80 = vlaneseq
    %v81 = vand.u32 %v80, 127
    %vm82 = vcmp.lt.s32.totalorder %v81, 17
    %v83 = vsel %vm82, %v77, %v79
    %v84 = vsel %vm82, %v75, %v77
    %v85 = vsel %vm82, %v73, %v75
    %v86 = vsel %vm82, %v79, %v73
    %v88 = vperm.slane %v36, 0
    %v89 = vperm.slane %v36, 1
    %v90 = vperm.slane %v36, 2
    %v91 = vperm.slane %v36, 3
    %v96 = vmul.f32 %v86, %v88
    %v97 = vmul.f32 %v85, %v89
    %v98 = vmul.f32 %v84, %v90
    %v99 = vmul.f32 %v83, %v91
    %100 = vst [vmem:[#allocation2] sm:$0xff] %v96
    %101 = vst [vmem:[#allocation2 + $0x8] sm:$0xff] %v97
    %102 = vst [vmem:[#allocation2 + $0x10] sm:$0xff] %v98
    %103 = vst [vmem:[#allocation2 + $0x18] sm:$0xff] %v99
    %104 = vrot.lane.b32.xlu0 %v31, 16
    %v105 = vpop.permute.xlu0 %104
    %106 = vrot.lane.b32.xlu0 %v32, 16
    %v107 = vpop.permute.xlu0 %106
    %108 = vrot.lane.b32.xlu0 %v33, 16
    %v109 = vpop.permute.xlu0 %108
    %110 = vrot.lane.b32.xlu0 %v34, 16
    %v111 = vpop.permute.xlu0 %110
    %vm112 = vcmp.lt.s32.totalorder %v81, 16
    %v113 = vsel %vm112, %v109, %v111
    %v114 = vsel %vm112, %v107, %v109
    %v115 = vsel %vm112, %v105, %v107
    %v116 = vsel %vm112, %v111, %v105
    %v118 = vperm.slane %v38, 0
    %v119 = vperm.slane %v38, 1
    %v120 = vperm.slane %v38, 2
    %v121 = vperm.slane %v38, 3
    %v126 = vmul.f32 %v116, %v118
    %v127 = vmul.f32 %v115, %v119
    %v128 = vmul.f32 %v114, %v120
    %v129 = vmul.f32 %v113, %v121
    %130 = vst [vmem:[#allocation2 + $0x20] sm:$0xff] %v126
    %131 = vst [vmem:[#allocation2 + $0x28] sm:$0xff] %v127
    %132 = vst [vmem:[#allocation2 + $0x30] sm:$0xff] %v128
    %133 = vst [vmem:[#allocation2 + $0x38] sm:$0xff] %v129
    %134 = vrot.lane.b32.xlu0 %v31, 15
    %v135 = vpop.permute.xlu0 %134
    %136 = vrot.lane.b32.xlu0 %v32, 15
    %v137 = vpop.permute.xlu0 %136
    %138 = vrot.lane.b32.xlu0 %v33, 15
    %v139 = vpop.permute.xlu0 %138
    %140 = vrot.lane.b32.xlu0 %v34, 15
    %v141 = vpop.permute.xlu0 %140
    %vm142 = vcmp.lt.s32.totalorder %v81, 15
    %v143 = vsel %vm142, %v139, %v141
    %v144 = vsel %vm142, %v137, %v139
    %v145 = vsel %vm142, %v135, %v137
    %v146 = vsel %vm142, %v141, %v135
    %v148 = vperm.slane %v40, 0
    %v149 = vperm.slane %v40, 1
    %v150 = vperm.slane %v40, 2
    %v151 = vperm.slane %v40, 3
    %v156 = vmul.f32 %v146, %v148
    %v157 = vmul.f32 %v145, %v149
    %v158 = vmul.f32 %v144, %v150
    %v159 = vmul.f32 %v143, %v151
    %160 = vst [vmem:[#allocation2 + $0x40] sm:$0xff] %v156
    %161 = vst [vmem:[#allocation2 + $0x48] sm:$0xff] %v157
    %162 = vst [vmem:[#allocation2 + $0x50] sm:$0xff] %v158
    %163 = vst [vmem:[#allocation2 + $0x58] sm:$0xff] %v159
    %164 = vrot.lane.b32.xlu0 %v31, 1
    %v165 = vpop.permute.xlu0 %164
    %166 = vrot.lane.b32.xlu0 %v32, 1
    %v167 = vpop.permute.xlu0 %166
    %168 = vrot.lane.b32.xlu0 %v33, 1
    %v169 = vpop.permute.xlu0 %168
    %170 = vrot.lane.b32.xlu0 %v34, 1
    %v171 = vpop.permute.xlu0 %170
    %vm172 = vcmp.lt.s32.totalorder %v81, 1
    %v173 = vsel %vm172, %v169, %v171
    %v174 = vsel %vm172, %v167, %v169
    %v175 = vsel %vm172, %v165, %v167
    %v176 = vsel %vm172, %v171, %v165
    %v178 = vperm.slane %v42, 0
    %v179 = vperm.slane %v42, 1
    %v180 = vperm.slane %v42, 2
    %v181 = vperm.slane %v42, 3
    %v186 = vmul.f32 %v176, %v178
    %v187 = vmul.f32 %v175, %v179
    %v188 = vmul.f32 %v174, %v180
    %v189 = vmul.f32 %v173, %v181
    %190 = vst [vmem:[#allocation2 + $0x60] sm:$0xff] %v186
    %191 = vst [vmem:[#allocation2 + $0x68] sm:$0xff] %v187
    %192 = vst [vmem:[#allocation2 + $0x70] sm:$0xff] %v188
    %193 = vst [vmem:[#allocation2 + $0x78] sm:$0xff] %v189
    %v195 = vperm.slane %v44, 0
    %v196 = vperm.slane %v44, 1
    %v197 = vperm.slane %v44, 2
    %v198 = vperm.slane %v44, 3
    %v203 = vmul.f32 %v31, %v195
    %v204 = vmul.f32 %v32, %v196
    %v205 = vmul.f32 %v33, %v197
    %v206 = vmul.f32 %v34, %v198
    %207 = vst [vmem:[#allocation2 + $0x80] sm:$0xff] %v203
    %208 = vst [vmem:[#allocation2 + $0x88] sm:$0xff] %v204
    %209 = vst [vmem:[#allocation2 + $0x90] sm:$0xff] %v205
    %210 = vst [vmem:[#allocation2 + $0x98] sm:$0xff] %v206
    %211 = vrot.lane.b32.xlu0 %v31, 127
    %v212 = vpop.permute.xlu0 %211
    %213 = vrot.lane.b32.xlu0 %v32, 127
    %v214 = vpop.permute.xlu0 %213
    %215 = vrot.lane.b32.xlu0 %v33, 127
    %v216 = vpop.permute.xlu0 %215
    %217 = vrot.lane.b32.xlu0 %v34, 127
    %v218 = vpop.permute.xlu0 %217
    %vm219 = vcmp.lt.s32.totalorder %v81, 127
    %v220 = vsel %vm219, %v216, %v218
    %v221 = vsel %vm219, %v214, %v216
    %v222 = vsel %vm219, %v212, %v214
    %v223 = vsel %vm219, %v218, %v212
    %v225 = vperm.slane %v46, 0
    %v226 = vperm.slane %v46, 1
    %v227 = vperm.slane %v46, 2
    %v228 = vperm.slane %v46, 3
    %v233 = vmul.f32 %v222, %v225
    %v234 = vmul.f32 %v221, %v226
    %v235 = vmul.f32 %v220, %v227
    %v236 = vmul.f32 %v223, %v228
    %237 = vst [vmem:[#allocation2 + $0xa0] sm:$0xff] %v233
    %238 = vst [vmem:[#allocation2 + $0xa8] sm:$0xff] %v234
    %239 = vst [vmem:[#allocation2 + $0xb0] sm:$0xff] %v235
    %240 = vst [vmem:[#allocation2 + $0xb8] sm:$0xff] %v236
    %241 = vrot.lane.b32.xlu0 %v31, 113
    %v242 = vpop.permute.xlu0 %241
    %243 = vrot.lane.b32.xlu0 %v32, 113
    %v244 = vpop.permute.xlu0 %243
    %245 = vrot.lane.b32.xlu0 %v33, 113
    %v246 = vpop.permute.xlu0 %245
    %247 = vrot.lane.b32.xlu0 %v34, 113
    %v248 = vpop.permute.xlu0 %247
    %vm249 = vcmp.lt.s32.totalorder %v81, 113
    %v250 = vsel %vm249, %v246, %v248
    %v251 = vsel %vm249, %v244, %v246
    %v252 = vsel %vm249, %v242, %v244
    %v253 = vsel %vm249, %v248, %v242
    %v255 = vperm.slane %v48, 0
    %v256 = vperm.slane %v48, 1
    %v257 = vperm.slane %v48, 2
    %v258 = vperm.slane %v48, 3
    %v263 = vmul.f32 %v252, %v255
    %v264 = vmul.f32 %v251, %v256
    %v265 = vmul.f32 %v250, %v257
    %v266 = vmul.f32 %v253, %v258
    %267 = vst [vmem:[#allocation2 + $0xc0] sm:$0xff] %v263
    %268 = vst [vmem:[#allocation2 + $0xc8] sm:$0xff] %v264
    %269 = vst [vmem:[#allocation2 + $0xd0] sm:$0xff] %v265
    %270 = vst [vmem:[#allocation2 + $0xd8] sm:$0xff] %v266
    %271 = vrot.lane.b32.xlu0 %v31, 112
    %v272 = vpop.permute.xlu0 %271
    %273 = vrot.lane.b32.xlu0 %v32, 112
    %v274 = vpop.permute.xlu0 %273
    %275 = vrot.lane.b32.xlu0 %v33, 112
    %v276 = vpop.permute.xlu0 %275
    %277 = vrot.lane.b32.xlu0 %v34, 112
    %v278 = vpop.permute.xlu0 %277
    %vm279 = vcmp.lt.s32.totalorder %v81, 112
    %v280 = vsel %vm279, %v276, %v278
    %v281 = vsel %vm279, %v274, %v276
    %v282 = vsel %vm279, %v272, %v274
    %v283 = vsel %vm279, %v278, %v272
    %v285 = vperm.slane %v50, 0
    %v286 = vperm.slane %v50, 1
    %v287 = vperm.slane %v50, 2
    %v288 = vperm.slane %v50, 3
    %v293 = vmul.f32 %v282, %v285
    %v294 = vmul.f32 %v281, %v286
    %v295 = vmul.f32 %v280, %v287
    %v296 = vmul.f32 %v283, %v288
    %297 = vst [vmem:[#allocation2 + $0xe0] sm:$0xff] %v293
    %298 = vst [vmem:[#allocation2 + $0xe8] sm:$0xff] %v294
    %299 = vst [vmem:[#allocation2 + $0xf0] sm:$0xff] %v295
    %300 = vst [vmem:[#allocation2 + $0xf8] sm:$0xff] %v296
    %301 = vrot.lane.b32.xlu0 %v31, 111
    %v302 = vpop.permute.xlu0 %301
    %303 = vrot.lane.b32.xlu0 %v32, 111
    %v304 = vpop.permute.xlu0 %303
    %305 = vrot.lane.b32.xlu0 %v33, 111
    %v306 = vpop.permute.xlu0 %305
    %307 = vrot.lane.b32.xlu0 %v34, 111
    %v308 = vpop.permute.xlu0 %307
    %vm309 = vcmp.lt.s32.totalorder %v81, 111
    %v310 = vsel %vm309, %v306, %v308
    %v311 = vsel %vm309, %v304, %v306
    %v312 = vsel %vm309, %v302, %v304
    %v313 = vsel %vm309, %v308, %v302
    %v315 = vperm.slane %v52, 0
    %v316 = vperm.slane %v52, 1
    %v317 = vperm.slane %v52, 2
    %v318 = vperm.slane %v52, 3
    %v323 = vmul.f32 %v312, %v315
    %v324 = vmul.f32 %v311, %v316
    %v325 = vmul.f32 %v310, %v317
    %v326 = vmul.f32 %v313, %v318
    %327 = vst [vmem:[#allocation2 + $0x100] sm:$0xff] %v323
    %328 = vst [vmem:[#allocation2 + $0x108] sm:$0xff] %v324
    %329 = vst [vmem:[#allocation2 + $0x110] sm:$0xff] %v325
    %330 = vst [vmem:[#allocation2 + $0x118] sm:$0xff] %v326
    %v331 = vld [vmem:[#allocation2] sm:$0xff]
    %v332 = vld [vmem:[#allocation2 + $0x8] sm:$0xff]
    %v333 = vld [vmem:[#allocation2 + $0x10] sm:$0xff]
    %v334 = vld [vmem:[#allocation2 + $0x18] sm:$0xff]
    %v335 = vld [vmem:[#allocation2 + $0x20] sm:$0xff]
    %v336 = vld [vmem:[#allocation2 + $0x28] sm:$0xff]
    %v337 = vld [vmem:[#allocation2 + $0x30] sm:$0xff]
    %v338 = vld [vmem:[#allocation2 + $0x38] sm:$0xff]
    %v339 = vld [vmem:[#allocation2 + $0x40] sm:$0xff]
    %v340 = vld [vmem:[#allocation2 + $0x48] sm:$0xff]
    %v341 = vld [vmem:[#allocation2 + $0x50] sm:$0xff]
    %v342 = vld [vmem:[#allocation2 + $0x58] sm:$0xff]
    %v343 = vld [vmem:[#allocation2 + $0x60] sm:$0xff]
    %v344 = vld [vmem:[#allocation2 + $0x68] sm:$0xff]
    %v345 = vld [vmem:[#allocation2 + $0x70] sm:$0xff]
    %v346 = vld [vmem:[#allocation2 + $0x78] sm:$0xff]
    %v347 = vld [vmem:[#allocation2 + $0x80] sm:$0xff]
    %v348 = vld [vmem:[#allocation2 + $0x88] sm:$0xff]
    %v349 = vld [vmem:[#allocation2 + $0x90] sm:$0xff]
    %v350 = vld [vmem:[#allocation2 + $0x98] sm:$0xff]
    %v351 = vld [vmem:[#allocation2 + $0xa0] sm:$0xff]
    %v352 = vld [vmem:[#allocation2 + $0xa8] sm:$0xff]
    %v353 = vld [vmem:[#allocation2 + $0xb0] sm:$0xff]
    %v354 = vld [vmem:[#allocation2 + $0xb8] sm:$0xff]
    %v355 = vld [vmem:[#allocation2 + $0xc0] sm:$0xff]
    %v356 = vld [vmem:[#allocation2 + $0xc8] sm:$0xff]
    %v357 = vld [vmem:[#allocation2 + $0xd0] sm:$0xff]
    %v358 = vld [vmem:[#allocation2 + $0xd8] sm:$0xff]
    %v359 = vld [vmem:[#allocation2 + $0xe0] sm:$0xff]
    %v360 = vld [vmem:[#allocation2 + $0xe8] sm:$0xff]
    %v361 = vld [vmem:[#allocation2 + $0xf0] sm:$0xff]
    %v362 = vld [vmem:[#allocation2 + $0xf8] sm:$0xff]
    %v363 = vld [vmem:[#allocation2 + $0x100] sm:$0xff]
    %v364 = vld [vmem:[#allocation2 + $0x108] sm:$0xff]
    %v365 = vld [vmem:[#allocation2 + $0x110] sm:$0xff]
    %v366 = vld [vmem:[#allocation2 + $0x118] sm:$0xff]
    %v367 = vld [vmem:[#allocation2 + $0x120] sm:$0xff]
    %v368 = vld [vmem:[#allocation2 + $0x128] sm:$0xff]
    %v369 = vld [vmem:[#allocation2 + $0x130] sm:$0xff]
    %v370 = vld [vmem:[#allocation2 + $0x138] sm:$0xff]
    %vm371 = vcmask 654336
    %v373 = vsel %vm371, %v70, 0
    %v376 = vsel %vm371, %v71, 0
    %378 = vmatpush.msra.mxu0 0.0
    %379 = vmatpush.msra.mxu0 0.0
    %380 = vmatpush.msra.mxu0 0.0
    %381 = vmatpush.msra.mxu0 0.0
    %382 = vmatpush.msra.mxu0 0.0
    %383 = vmatpush.msra.mxu0 0.0
    %384 = vmatpush.msra.mxu0 %v367
    %385 = vmatpush.msra.mxu0 %v363
    %386 = vmatpush.msra.mxu0 %v359
    %387 = vmatpush.msra.mxu0 %v355
    %388 = vmatpush.msra.mxu0 %v351
    %389 = vmatpush.msra.mxu0 %v347
    %390 = vmatpush.msra.mxu0 %v343
    %391 = vmatpush.msra.mxu0 %v339
    %392 = vmatpush.msra.mxu0 %v335
    %393 = vmatpush.msra.mxu0 %v331
    %394 = vmatmul.f32.gmra.mxu0 %v373
    %v395 = vpop.f32.mrf.mxu0
    %v396 = vadd.f32 0.0, %v395
    %397 = vmatmul.f32.gmra.mxu0 %v376
    %v398 = vpop.f32.mrf.mxu0
    %v399 = vadd.f32 0.0, %v398
    %400 = vdwg.mxu0
    %401 = vmatpush.msra.mxu0 0.0
    %402 = vmatpush.msra.mxu0 0.0
    %403 = vmatpush.msra.mxu0 0.0
    %404 = vmatpush.msra.mxu0 0.0
    %405 = vmatpush.msra.mxu0 0.0
    %406 = vmatpush.msra.mxu0 0.0
    %407 = vmatpush.msra.mxu0 %v368
    %408 = vmatpush.msra.mxu0 %v364
    %409 = vmatpush.msra.mxu0 %v360
    %410 = vmatpush.msra.mxu0 %v356
    %411 = vmatpush.msra.mxu0 %v352
    %412 = vmatpush.msra.mxu0 %v348
    %413 = vmatpush.msra.mxu0 %v344
    %414 = vmatpush.msra.mxu0 %v340
    %415 = vmatpush.msra.mxu0 %v336
    %416 = vmatpush.msra.mxu0 %v332
    %417 = vmatmul.f32.gmra.mxu0 %v373
    %v418 = vpop.f32.mrf.mxu0
    %v419 = vadd.f32 0.0, %v418
    %420 = vmatmul.f32.gmra.mxu0 %v376
    %v421 = vpop.f32.mrf.mxu0
    %v422 = vadd.f32 0.0, %v421
    %423 = vdwg.mxu0
    %424 = vmatpush.msra.mxu0 0.0
    %425 = vmatpush.msra.mxu0 0.0
    %426 = vmatpush.msra.mxu0 0.0
    %427 = vmatpush.msra.mxu0 0.0
    %428 = vmatpush.msra.mxu0 0.0
    %429 = vmatpush.msra.mxu0 0.0
    %430 = vmatpush.msra.mxu0 %v369
    %431 = vmatpush.msra.mxu0 %v365
    %432 = vmatpush.msra.mxu0 %v361
    %433 = vmatpush.msra.mxu0 %v357
    %434 = vmatpush.msra.mxu0 %v353
    %435 = vmatpush.msra.mxu0 %v349
    %436 = vmatpush.msra.mxu0 %v345
    %437 = vmatpush.msra.mxu0 %v341
    %438 = vmatpush.msra.mxu0 %v337
    %439 = vmatpush.msra.mxu0 %v333
    %440 = vmatmul.f32.gmra.mxu0 %v373
    %v441 = vpop.f32.mrf.mxu0
    %v442 = vadd.f32 0.0, %v441
    %443 = vmatmul.f32.gmra.mxu0 %v376
    %v444 = vpop.f32.mrf.mxu0
    %v445 = vadd.f32 0.0, %v444
    %446 = vdwg.mxu0
    %447 = vmatpush.msra.mxu0 0.0
    %448 = vmatpush.msra.mxu0 0.0
    %449 = vmatpush.msra.mxu0 0.0
    %450 = vmatpush.msra.mxu0 0.0
    %451 = vmatpush.msra.mxu0 0.0
    %452 = vmatpush.msra.mxu0 0.0
    %453 = vmatpush.msra.mxu0 %v370
    %454 = vmatpush.msra.mxu0 %v366
    %455 = vmatpush.msra.mxu0 %v362
    %456 = vmatpush.msra.mxu0 %v358
    %457 = vmatpush.msra.mxu0 %v354
    %458 = vmatpush.msra.mxu0 %v350
    %459 = vmatpush.msra.mxu0 %v346
    %460 = vmatpush.msra.mxu0 %v342
    %461 = vmatpush.msra.mxu0 %v338
    %462 = vmatpush.msra.mxu0 %v334
    %463 = vmatmul.f32.gmra.mxu0 %v373
    %v464 = vpop.f32.mrf.mxu0
    %v465 = vadd.f32 0.0, %v464
    %466 = vmatmul.f32.gmra.mxu0 %v376
    %v467 = vpop.f32.mrf.mxu0
    %v468 = vadd.f32 0.0, %v467
    %469 = vdwg.mxu0
    %v470 = vmax.f32 %v396, 0.0
    %v471 = vmax.f32 %v419, 0.0
    %v472 = vmax.f32 %v442, 0.0
    %v473 = vmax.f32 %v465, 0.0
    %v474 = vadd.f32 %v470, %v471
    %v475 = vadd.f32 %v474, %v472
    %v476 = vadd.f32 %v475, %v473
    %477 = vadd.xlane.f32.xlu0 %v476
    %v478 = vpop.xlane.xlu0 %477
    %v479 = vmul.f32 %v478, 0.001953125
    %v480 = vmul.f32 %v470, %v470
    %v481 = vmul.f32 %v471, %v471
    %v482 = vmul.f32 %v472, %v472
    %v483 = vmul.f32 %v473, %v473
    %v484 = vadd.f32 %v480, %v481
    %v485 = vadd.f32 %v484, %v482
    %v486 = vadd.f32 %v485, %v483
    %487 = vadd.xlane.f32.xlu0 %v486
    %v488 = vpop.xlane.xlu0 %487
    %v489 = vmul.f32 %v488, 0.001953125
    %v490 = vmul.f32 %v479, %v479
    %v491 = vsub.f32 %v489, %v490
    %v492 = vmax.f32 %v491, 0.0
    %v493 = vadd.f32 %v492, 1e-05
    %v494 = vrsqrt.pop %v493
    %v495 = vmul.f32 %v494, %v493
    %v496 = vmul.f32 %v495, %v494
    %v497 = vmul.f32 0.5, %v496
    %v498 = vsub.f32 1.5, %v497
    %v499 = vmul.f32 %v494, %v498
    %vm500 = vweird.f32 %v493
    %vm501 = vweird.f32 %v494
    %vm502 = vmor %vm500, %vm501
    %v503 = vsel %vm502, %v494, %v499
    %v504 = vmul.f32 %v62, %v503
    %v505 = vmul.f32 %v479, %v504
    %v506 = vsub.f32 %v63, %v505
    %508 = vset.pattern.permute.xlu0 0
    %509 = vperm.xlu0 %508, %v504
    %v510 = vpop.permute.xlu0 %509
    %v512 = vmul.f32 %v470, %v510
    %v513 = vmul.f32 %v471, %v510
    %v514 = vmul.f32 %v472, %v510
    %v515 = vmul.f32 %v473, %v510
    %517 = vset.pattern.permute.xlu0 0
    %518 = vperm.xlu0 %517, %v506
    %v519 = vpop.permute.xlu0 %518
    %v521 = vadd.f32 %v512, %v519
    %v522 = vadd.f32 %v513, %v519
    %v523 = vadd.f32 %v514, %v519
    %v524 = vadd.f32 %v515, %v519
    %v525 = vld [vmem:[%s1 + $0x10] sm:$0xff]
    %526 = vrot.lane.b32.xlu0 %v521, 17
    %v527 = vpop.permute.xlu0 %526
    %528 = vrot.lane.b32.xlu0 %v522, 17
    %v529 = vpop.permute.xlu0 %528
    %530 = vrot.lane.b32.xlu0 %v523, 17
    %v531 = vpop.permute.xlu0 %530
    %532 = vrot.lane.b32.xlu0 %v524, 17
    %v533 = vpop.permute.xlu0 %532
    %v534 = vsel %vm82, %v531, %v533
    %v535 = vsel %vm82, %v529, %v531
    %v536 = vsel %vm82, %v527, %v529
    %v537 = vsel %vm82, %v533, %v527
    %v538 = vmul.f32 %v537, %v88
    %v539 = vmul.f32 %v536, %v89
    %v540 = vmul.f32 %v535, %v90
    %v541 = vmul.f32 %v534, %v91
    %542 = vst [vmem:[#allocation2] sm:$0xff] %v538
    %543 = vst [vmem:[#allocation2 + $0x8] sm:$0xff] %v539
    %544 = vst [vmem:[#allocation2 + $0x10] sm:$0xff] %v540
    %545 = vst [vmem:[#allocation2 + $0x18] sm:$0xff] %v541
    %546 = vrot.lane.b32.xlu0 %v521, 16
    %v547 = vpop.permute.xlu0 %546
    %548 = vrot.lane.b32.xlu0 %v522, 16
    %v549 = vpop.permute.xlu0 %548
    %550 = vrot.lane.b32.xlu0 %v523, 16
    %v551 = vpop.permute.xlu0 %550
    %552 = vrot.lane.b32.xlu0 %v524, 16
    %v553 = vpop.permute.xlu0 %552
    %v554 = vsel %vm112, %v551, %v553
    %v555 = vsel %vm112, %v549, %v551
    %v556 = vsel %vm112, %v547, %v549
    %v557 = vsel %vm112, %v553, %v547
    %v558 = vmul.f32 %v557, %v118
    %v559 = vmul.f32 %v556, %v119
    %v560 = vmul.f32 %v555, %v120
    %v561 = vmul.f32 %v554, %v121
    %562 = vst [vmem:[#allocation2 + $0x20] sm:$0xff] %v558
    %563 = vst [vmem:[#allocation2 + $0x28] sm:$0xff] %v559
    %564 = vst [vmem:[#allocation2 + $0x30] sm:$0xff] %v560
    %565 = vst [vmem:[#allocation2 + $0x38] sm:$0xff] %v561
    %566 = vrot.lane.b32.xlu0 %v521, 15
    %v567 = vpop.permute.xlu0 %566
    %568 = vrot.lane.b32.xlu0 %v522, 15
    %v569 = vpop.permute.xlu0 %568
    %570 = vrot.lane.b32.xlu0 %v523, 15
    %v571 = vpop.permute.xlu0 %570
    %572 = vrot.lane.b32.xlu0 %v524, 15
    %v573 = vpop.permute.xlu0 %572
    %v574 = vsel %vm142, %v571, %v573
    %v575 = vsel %vm142, %v569, %v571
    %v576 = vsel %vm142, %v567, %v569
    %v577 = vsel %vm142, %v573, %v567
    %v578 = vmul.f32 %v577, %v148
    %v579 = vmul.f32 %v576, %v149
    %v580 = vmul.f32 %v575, %v150
    %v581 = vmul.f32 %v574, %v151
    %582 = vst [vmem:[#allocation2 + $0x40] sm:$0xff] %v578
    %583 = vst [vmem:[#allocation2 + $0x48] sm:$0xff] %v579
    %584 = vst [vmem:[#allocation2 + $0x50] sm:$0xff] %v580
    %585 = vst [vmem:[#allocation2 + $0x58] sm:$0xff] %v581
    %586 = vrot.lane.b32.xlu0 %v521, 1
    %v587 = vpop.permute.xlu0 %586
    %588 = vrot.lane.b32.xlu0 %v522, 1
    %v589 = vpop.permute.xlu0 %588
    %590 = vrot.lane.b32.xlu0 %v523, 1
    %v591 = vpop.permute.xlu0 %590
    %592 = vrot.lane.b32.xlu0 %v524, 1
    %v593 = vpop.permute.xlu0 %592
    %v594 = vsel %vm172, %v591, %v593
    %v595 = vsel %vm172, %v589, %v591
    %v596 = vsel %vm172, %v587, %v589
    %v597 = vsel %vm172, %v593, %v587
    %v598 = vmul.f32 %v597, %v178
    %v599 = vmul.f32 %v596, %v179
    %v600 = vmul.f32 %v595, %v180
    %v601 = vmul.f32 %v594, %v181
    %602 = vst [vmem:[#allocation2 + $0x60] sm:$0xff] %v598
    %603 = vst [vmem:[#allocation2 + $0x68] sm:$0xff] %v599
    %604 = vst [vmem:[#allocation2 + $0x70] sm:$0xff] %v600
    %605 = vst [vmem:[#allocation2 + $0x78] sm:$0xff] %v601
    %v606 = vmul.f32 %v521, %v195
    %v607 = vmul.f32 %v522, %v196
    %v608 = vmul.f32 %v523, %v197
    %v609 = vmul.f32 %v524, %v198
    %610 = vst [vmem:[#allocation2 + $0x80] sm:$0xff] %v606
    %611 = vst [vmem:[#allocation2 + $0x88] sm:$0xff] %v607
    %612 = vst [vmem:[#allocation2 + $0x90] sm:$0xff] %v608
    %613 = vst [vmem:[#allocation2 + $0x98] sm:$0xff] %v609
    %614 = vrot.lane.b32.xlu0 %v521, 127
    %v615 = vpop.permute.xlu0 %614
    %616 = vrot.lane.b32.xlu0 %v522, 127
    %v617 = vpop.permute.xlu0 %616
    %618 = vrot.lane.b32.xlu0 %v523, 127
    %v619 = vpop.permute.xlu0 %618
    %620 = vrot.lane.b32.xlu0 %v524, 127
    %v621 = vpop.permute.xlu0 %620
    %v622 = vsel %vm219, %v619, %v621
    %v623 = vsel %vm219, %v617, %v619
    %v624 = vsel %vm219, %v615, %v617
    %v625 = vsel %vm219, %v621, %v615
    %v626 = vmul.f32 %v624, %v225
    %v627 = vmul.f32 %v623, %v226
    %v628 = vmul.f32 %v622, %v227
    %v629 = vmul.f32 %v625, %v228
    %630 = vst [vmem:[#allocation2 + $0xa0] sm:$0xff] %v626
    %631 = vst [vmem:[#allocation2 + $0xa8] sm:$0xff] %v627
    %632 = vst [vmem:[#allocation2 + $0xb0] sm:$0xff] %v628
    %633 = vst [vmem:[#allocation2 + $0xb8] sm:$0xff] %v629
    %634 = vrot.lane.b32.xlu0 %v521, 113
    %v635 = vpop.permute.xlu0 %634
    %636 = vrot.lane.b32.xlu0 %v522, 113
    %v637 = vpop.permute.xlu0 %636
    %638 = vrot.lane.b32.xlu0 %v523, 113
    %v639 = vpop.permute.xlu0 %638
    %640 = vrot.lane.b32.xlu0 %v524, 113
    %v641 = vpop.permute.xlu0 %640
    %v642 = vsel %vm249, %v639, %v641
    %v643 = vsel %vm249, %v637, %v639
    %v644 = vsel %vm249, %v635, %v637
    %v645 = vsel %vm249, %v641, %v635
    %v646 = vmul.f32 %v644, %v255
    %v647 = vmul.f32 %v643, %v256
    %v648 = vmul.f32 %v642, %v257
    %v649 = vmul.f32 %v645, %v258
    %650 = vst [vmem:[#allocation2 + $0xc0] sm:$0xff] %v646
    %651 = vst [vmem:[#allocation2 + $0xc8] sm:$0xff] %v647
    %652 = vst [vmem:[#allocation2 + $0xd0] sm:$0xff] %v648
    %653 = vst [vmem:[#allocation2 + $0xd8] sm:$0xff] %v649
    %654 = vrot.lane.b32.xlu0 %v521, 112
    %v655 = vpop.permute.xlu0 %654
    %656 = vrot.lane.b32.xlu0 %v522, 112
    %v657 = vpop.permute.xlu0 %656
    %658 = vrot.lane.b32.xlu0 %v523, 112
    %v659 = vpop.permute.xlu0 %658
    %660 = vrot.lane.b32.xlu0 %v524, 112
    %v661 = vpop.permute.xlu0 %660
    %v662 = vsel %vm279, %v659, %v661
    %v663 = vsel %vm279, %v657, %v659
    %v664 = vsel %vm279, %v655, %v657
    %v665 = vsel %vm279, %v661, %v655
    %v666 = vmul.f32 %v664, %v285
    %v667 = vmul.f32 %v663, %v286
    %v668 = vmul.f32 %v662, %v287
    %v669 = vmul.f32 %v665, %v288
    %670 = vst [vmem:[#allocation2 + $0xe0] sm:$0xff] %v666
    %671 = vst [vmem:[#allocation2 + $0xe8] sm:$0xff] %v667
    %672 = vst [vmem:[#allocation2 + $0xf0] sm:$0xff] %v668
    %673 = vst [vmem:[#allocation2 + $0xf8] sm:$0xff] %v669
    %674 = vrot.lane.b32.xlu0 %v521, 111
    %v675 = vpop.permute.xlu0 %674
    %676 = vrot.lane.b32.xlu0 %v522, 111
    %v677 = vpop.permute.xlu0 %676
    %678 = vrot.lane.b32.xlu0 %v523, 111
    %v679 = vpop.permute.xlu0 %678
    %680 = vrot.lane.b32.xlu0 %v524, 111
    %v681 = vpop.permute.xlu0 %680
    %v682 = vsel %vm309, %v679, %v681
    %v683 = vsel %vm309, %v677, %v679
    %v684 = vsel %vm309, %v675, %v677
    %v685 = vsel %vm309, %v681, %v675
    %v686 = vmul.f32 %v684, %v315
    %v687 = vmul.f32 %v683, %v316
    %v688 = vmul.f32 %v682, %v317
    %v689 = vmul.f32 %v685, %v318
    %690 = vst [vmem:[#allocation2 + $0x100] sm:$0xff] %v686
    %691 = vst [vmem:[#allocation2 + $0x108] sm:$0xff] %v687
    %692 = vst [vmem:[#allocation2 + $0x110] sm:$0xff] %v688
    %693 = vst [vmem:[#allocation2 + $0x118] sm:$0xff] %v689
    %v694 = vld [vmem:[#allocation2] sm:$0xff]
    %v695 = vld [vmem:[#allocation2 + $0x8] sm:$0xff]
    %v696 = vld [vmem:[#allocation2 + $0x10] sm:$0xff]
    %v697 = vld [vmem:[#allocation2 + $0x18] sm:$0xff]
    %v698 = vld [vmem:[#allocation2 + $0x20] sm:$0xff]
    %v699 = vld [vmem:[#allocation2 + $0x28] sm:$0xff]
    %v700 = vld [vmem:[#allocation2 + $0x30] sm:$0xff]
    %v701 = vld [vmem:[#allocation2 + $0x38] sm:$0xff]
    %v702 = vld [vmem:[#allocation2 + $0x40] sm:$0xff]
    %v703 = vld [vmem:[#allocation2 + $0x48] sm:$0xff]
    %v704 = vld [vmem:[#allocation2 + $0x50] sm:$0xff]
    %v705 = vld [vmem:[#allocation2 + $0x58] sm:$0xff]
    %v706 = vld [vmem:[#allocation2 + $0x60] sm:$0xff]
    %v707 = vld [vmem:[#allocation2 + $0x68] sm:$0xff]
    %v708 = vld [vmem:[#allocation2 + $0x70] sm:$0xff]
    %v709 = vld [vmem:[#allocation2 + $0x78] sm:$0xff]
    %v710 = vld [vmem:[#allocation2 + $0x80] sm:$0xff]
    %v711 = vld [vmem:[#allocation2 + $0x88] sm:$0xff]
    %v712 = vld [vmem:[#allocation2 + $0x90] sm:$0xff]
    %v713 = vld [vmem:[#allocation2 + $0x98] sm:$0xff]
    %v714 = vld [vmem:[#allocation2 + $0xa0] sm:$0xff]
    %v715 = vld [vmem:[#allocation2 + $0xa8] sm:$0xff]
    %v716 = vld [vmem:[#allocation2 + $0xb0] sm:$0xff]
    %v717 = vld [vmem:[#allocation2 + $0xb8] sm:$0xff]
    %v718 = vld [vmem:[#allocation2 + $0xc0] sm:$0xff]
    %v719 = vld [vmem:[#allocation2 + $0xc8] sm:$0xff]
    %v720 = vld [vmem:[#allocation2 + $0xd0] sm:$0xff]
    %v721 = vld [vmem:[#allocation2 + $0xd8] sm:$0xff]
    %v722 = vld [vmem:[#allocation2 + $0xe0] sm:$0xff]
    %v723 = vld [vmem:[#allocation2 + $0xe8] sm:$0xff]
    %v724 = vld [vmem:[#allocation2 + $0xf0] sm:$0xff]
    %v725 = vld [vmem:[#allocation2 + $0xf8] sm:$0xff]
    %v726 = vld [vmem:[#allocation2 + $0x100] sm:$0xff]
    %v727 = vld [vmem:[#allocation2 + $0x108] sm:$0xff]
    %v728 = vld [vmem:[#allocation2 + $0x110] sm:$0xff]
    %v729 = vld [vmem:[#allocation2 + $0x118] sm:$0xff]
    %v730 = vld [vmem:[#allocation2 + $0x120] sm:$0xff]
    %v731 = vld [vmem:[#allocation2 + $0x128] sm:$0xff]
    %v732 = vld [vmem:[#allocation2 + $0x130] sm:$0xff]
    %v733 = vld [vmem:[#allocation2 + $0x138] sm:$0xff]
    %v735 = vsel %vm371, %v525, 0
    %737 = vmatpush.msra.mxu0 0.0
    %738 = vmatpush.msra.mxu0 0.0
    %739 = vmatpush.msra.mxu0 0.0
    %740 = vmatpush.msra.mxu0 0.0
    %741 = vmatpush.msra.mxu0 0.0
    %742 = vmatpush.msra.mxu0 0.0
    %743 = vmatpush.msra.mxu0 %v730
    %744 = vmatpush.msra.mxu0 %v726
    %745 = vmatpush.msra.mxu0 %v722
    %746 = vmatpush.msra.mxu0 %v718
    %747 = vmatpush.msra.mxu0 %v714
    %748 = vmatpush.msra.mxu0 %v710
    %749 = vmatpush.msra.mxu0 %v706
    %750 = vmatpush.msra.mxu0 %v702
    %751 = vmatpush.msra.mxu0 %v698
    %752 = vmatpush.msra.mxu0 %v694
    %753 = vmatmul.f32.gmra.mxu0 %v735
    %v754 = vpop.f32.mrf.mxu0
    %v755 = vadd.f32 0.0, %v754
    %756 = vdwg.mxu0
    %757 = vmatpush.msra.mxu0 0.0
    %758 = vmatpush.msra.mxu0 0.0
    %759 = vmatpush.msra.mxu0 0.0
    %760 = vmatpush.msra.mxu0 0.0
    %761 = vmatpush.msra.mxu0 0.0
    %762 = vmatpush.msra.mxu0 0.0
    %763 = vmatpush.msra.mxu0 %v731
    %764 = vmatpush.msra.mxu0 %v727
    %765 = vmatpush.msra.mxu0 %v723
    %766 = vmatpush.msra.mxu0 %v719
    %767 = vmatpush.msra.mxu0 %v715
    %768 = vmatpush.msra.mxu0 %v711
    %769 = vmatpush.msra.mxu0 %v707
    %770 = vmatpush.msra.mxu0 %v703
    %771 = vmatpush.msra.mxu0 %v699
    %772 = vmatpush.msra.mxu0 %v695
    %773 = vmatmul.f32.gmra.mxu0 %v735
    %v774 = vpop.f32.mrf.mxu0
    %v775 = vadd.f32 0.0, %v774
    %776 = vdwg.mxu0
    %777 = vmatpush.msra.mxu0 0.0
    %778 = vmatpush.msra.mxu0 0.0
    %779 = vmatpush.msra.mxu0 0.0
    %780 = vmatpush.msra.mxu0 0.0
    %781 = vmatpush.msra.mxu0 0.0
    %782 = vmatpush.msra.mxu0 0.0
    %783 = vmatpush.msra.mxu0 %v732
    %784 = vmatpush.msra.mxu0 %v728
    %785 = vmatpush.msra.mxu0 %v724
    %786 = vmatpush.msra.mxu0 %v720
    %787 = vmatpush.msra.mxu0 %v716
    %788 = vmatpush.msra.mxu0 %v712
    %789 = vmatpush.msra.mxu0 %v708
    %790 = vmatpush.msra.mxu0 %v704
    %791 = vmatpush.msra.mxu0 %v700
    %792 = vmatpush.msra.mxu0 %v696
    %793 = vmatmul.f32.gmra.mxu0 %v735
    %v794 = vpop.f32.mrf.mxu0
    %v795 = vadd.f32 0.0, %v794
    %796 = vdwg.mxu0
    %797 = vmatpush.msra.mxu0 0.0
    %798 = vmatpush.msra.mxu0 0.0
    %799 = vmatpush.msra.mxu0 0.0
    %800 = vmatpush.msra.mxu0 0.0
    %801 = vmatpush.msra.mxu0 0.0
    %802 = vmatpush.msra.mxu0 0.0
    %803 = vmatpush.msra.mxu0 %v733
    %804 = vmatpush.msra.mxu0 %v729
    %805 = vmatpush.msra.mxu0 %v725
    %806 = vmatpush.msra.mxu0 %v721
    %807 = vmatpush.msra.mxu0 %v717
    %808 = vmatpush.msra.mxu0 %v713
    %809 = vmatpush.msra.mxu0 %v709
    %810 = vmatpush.msra.mxu0 %v705
    %811 = vmatpush.msra.mxu0 %v701
    %812 = vmatpush.msra.mxu0 %v697
    %813 = vmatmul.f32.gmra.mxu0 %v735
    %v814 = vpop.f32.mrf.mxu0
    %v815 = vadd.f32 0.0, %v814
    %816 = vdwg.mxu0
    %v817 = vmax.f32 %v755, 0.0
    %v818 = vmax.f32 %v775, 0.0
    %v819 = vmax.f32 %v795, 0.0
    %v820 = vmax.f32 %v815, 0.0
    %v821 = vadd.f32 %v817, %v818
    %v822 = vadd.f32 %v821, %v819
    %v823 = vadd.f32 %v822, %v820
    %824 = vadd.xlane.f32.xlu0 %v823
    %v825 = vpop.xlane.xlu0 %824
    %v826 = vmul.f32 %v825, 0.001953125
    %v827 = vmul.f32 %v817, %v817
    %v828 = vmul.f32 %v818, %v818
    %v829 = vmul.f32 %v819, %v819
    %v830 = vmul.f32 %v820, %v820
    %v831 = vadd.f32 %v827, %v828
    %v832 = vadd.f32 %v831, %v829
    %v833 = vadd.f32 %v832, %v830
    %834 = vadd.xlane.f32.xlu0 %v833
    %v835 = vpop.xlane.xlu0 %834
    %v836 = vmul.f32 %v835, 0.001953125
    %v837 = vmul.f32 %v826, %v826
    %v838 = vsub.f32 %v836, %v837
    %v839 = vmax.f32 %v838, 0.0
    %v840 = vadd.f32 %v839, 1e-05
    %v841 = vrsqrt.pop %v840
    %v842 = vmul.f32 %v841, %v840
    %v843 = vmul.f32 %v842, %v841
    %v844 = vmul.f32 0.5, %v843
    %v845 = vsub.f32 1.5, %v844
    %v846 = vmul.f32 %v841, %v845
    %vm847 = vweird.f32 %v840
    %vm848 = vweird.f32 %v841
    %vm849 = vmor %vm847, %vm848
    %v850 = vsel %vm849, %v841, %v846
    %v851 = vmul.f32 %v64, %v850
    %v852 = vmul.f32 %v826, %v851
    %v853 = vsub.f32 %v65, %v852
    %855 = vset.pattern.permute.xlu0 0
    %856 = vperm.xlu0 %855, %v851
    %v857 = vpop.permute.xlu0 %856
    %v859 = vmul.f32 %v817, %v857
    %v860 = vmul.f32 %v818, %v857
    %v861 = vmul.f32 %v819, %v857
    %v862 = vmul.f32 %v820, %v857
    %864 = vset.pattern.permute.xlu0 0
    %865 = vperm.xlu0 %864, %v853
    %v866 = vpop.permute.xlu0 %865
    %v868 = vadd.f32 %v859, %v866
    %v869 = vadd.f32 %v860, %v866
    %v870 = vadd.f32 %v861, %v866
    %v871 = vadd.f32 %v862, %v866
    %vm872 = vcmask 64512
    %v874 = vsel %vm872, %v69, 0
    %876 = vmatpush.msra.mxu0 0.0
    %877 = vmatpush.msra.mxu0 0.0
    %878 = vmatpush.msra.mxu0 0.0
    %879 = vmatpush.msra.mxu0 0.0
    %880 = vmatpush.msra.mxu0 0.0
    %881 = vmatpush.msra.mxu0 0.0
    %882 = vmatpush.msra.mxu0 0.0
    %883 = vmatpush.msra.mxu0 0.0
    %884 = vmatpush.msra.mxu0 0.0
    %885 = vmatpush.msra.mxu0 0.0
    %886 = vmatpush.msra.mxu0 0.0
    %887 = vmatpush.msra.mxu0 0.0
    %888 = vmatpush.msra.mxu0 0.0
    %889 = vmatpush.msra.mxu0 0.0
    %890 = vmatpush.msra.mxu0 0.0
    %891 = vmatpush.msra.mxu0 %v868
    %892 = vmatmul.f32.gmra.mxu0 %v874
    %v893 = vpop.f32.mrf.mxu0
    %v894 = vadd.f32 %v399, %v893
    %895 = vdwg.mxu0
    %896 = vmatpush.msra.mxu0 0.0
    %897 = vmatpush.msra.mxu0 0.0
    %898 = vmatpush.msra.mxu0 0.0
    %899 = vmatpush.msra.mxu0 0.0
    %900 = vmatpush.msra.mxu0 0.0
    %901 = vmatpush.msra.mxu0 0.0
    %902 = vmatpush.msra.mxu0 0.0
    %903 = vmatpush.msra.mxu0 0.0
    %904 = vmatpush.msra.mxu0 0.0
    %905 = vmatpush.msra.mxu0 0.0
    %906 = vmatpush.msra.mxu0 0.0
    %907 = vmatpush.msra.mxu0 0.0
    %908 = vmatpush.msra.mxu0 0.0
    %909 = vmatpush.msra.mxu0 0.0
    %910 = vmatpush.msra.mxu0 0.0
    %911 = vmatpush.msra.mxu0 %v869
    %912 = vmatmul.f32.gmra.mxu0 %v874
    %v913 = vpop.f32.mrf.mxu0
    %v914 = vadd.f32 %v422, %v913
    %915 = vdwg.mxu0
    %916 = vmatpush.msra.mxu0 0.0
    %917 = vmatpush.msra.mxu0 0.0
    %918 = vmatpush.msra.mxu0 0.0
    %919 = vmatpush.msra.mxu0 0.0
    %920 = vmatpush.msra.mxu0 0.0
    %921 = vmatpush.msra.mxu0 0.0
    %922 = vmatpush.msra.mxu0 0.0
    %923 = vmatpush.msra.mxu0 0.0
    %924 = vmatpush.msra.mxu0 0.0
    %925 = vmatpush.msra.mxu0 0.0
    %926 = vmatpush.msra.mxu0 0.0
    %927 = vmatpush.msra.mxu0 0.0
    %928 = vmatpush.msra.mxu0 0.0
    %929 = vmatpush.msra.mxu0 0.0
    %930 = vmatpush.msra.mxu0 0.0
    %931 = vmatpush.msra.mxu0 %v870
    %932 = vmatmul.f32.gmra.mxu0 %v874
    %v933 = vpop.f32.mrf.mxu0
    %v934 = vadd.f32 %v445, %v933
    %935 = vdwg.mxu0
    %936 = vmatpush.msra.mxu0 0.0
    %937 = vmatpush.msra.mxu0 0.0
    %938 = vmatpush.msra.mxu0 0.0
    %939 = vmatpush.msra.mxu0 0.0
    %940 = vmatpush.msra.mxu0 0.0
    %941 = vmatpush.msra.mxu0 0.0
    %942 = vmatpush.msra.mxu0 0.0
    %943 = vmatpush.msra.mxu0 0.0
    %944 = vmatpush.msra.mxu0 0.0
    %945 = vmatpush.msra.mxu0 0.0
    %946 = vmatpush.msra.mxu0 0.0
    %947 = vmatpush.msra.mxu0 0.0
    %948 = vmatpush.msra.mxu0 0.0
    %949 = vmatpush.msra.mxu0 0.0
    %950 = vmatpush.msra.mxu0 0.0
    %951 = vmatpush.msra.mxu0 %v871
    %952 = vmatmul.f32.gmra.mxu0 %v874
    %v953 = vpop.f32.mrf.mxu0
    %v954 = vadd.f32 %v468, %v953
    %955 = vdwg.mxu0
    %957 = vset.pattern.permute.xlu0 0
    %958 = vperm.xlu0 %957, %v68
    %v959 = vpop.permute.xlu0 %958
    %v961 = vadd.f32 %v894, %v959
    %v962 = vadd.f32 %v914, %v959
    %v963 = vadd.f32 %v934, %v959
    %v964 = vadd.f32 %v954, %v959
    %v965 = vmax.f32 %v961, 0.0
    %v966 = vmax.f32 %v962, 0.0
    %v967 = vmax.f32 %v963, 0.0
    %v968 = vmax.f32 %v964, 0.0
    %v969 = vadd.f32 %v965, %v966
    %v970 = vadd.f32 %v969, %v967
    %v971 = vadd.f32 %v970, %v968
    %972 = vadd.xlane.f32.xlu0 %v971
    %v973 = vpop.xlane.xlu0 %972
    %v974 = vmul.f32 %v973, 0.001953125
    %v975 = vmul.f32 %v965, %v965
    %v976 = vmul.f32 %v966, %v966
    %v977 = vmul.f32 %v967, %v967
    %v978 = vmul.f32 %v968, %v968
    %v979 = vadd.f32 %v975, %v976
    %v980 = vadd.f32 %v979, %v977
    %v981 = vadd.f32 %v980, %v978
    %982 = vadd.xlane.f32.xlu0 %v981
    %v983 = vpop.xlane.xlu0 %982
    %v984 = vmul.f32 %v983, 0.001953125
    %v985 = vmul.f32 %v974, %v974
    %v986 = vsub.f32 %v984, %v985
    %v987 = vmax.f32 %v986, 0.0
    %v988 = vadd.f32 %v987, 1e-05
    %v989 = vrsqrt.pop %v988
    %v990 = vmul.f32 %v989, %v988
    %v991 = vmul.f32 %v990, %v989
    %v992 = vmul.f32 0.5, %v991
    %v993 = vsub.f32 1.5, %v992
    %v994 = vmul.f32 %v989, %v993
    %vm995 = vweird.f32 %v988
    %vm996 = vweird.f32 %v989
    %vm997 = vmor %vm995, %vm996
    %v998 = vsel %vm997, %v989, %v994
    %v999 = vmul.f32 %v66, %v998
    %v1000 = vmul.f32 %v974, %v999
    %v1001 = vsub.f32 %v67, %v1000
    %1003 = vset.pattern.permute.xlu0 0
    %1004 = vperm.xlu0 %1003, %v999
    %v1005 = vpop.permute.xlu0 %1004
    %v1007 = vmul.f32 %v965, %v1005
    %v1008 = vmul.f32 %v966, %v1005
    %v1009 = vmul.f32 %v967, %v1005
    %v1010 = vmul.f32 %v968, %v1005
    %1012 = vset.pattern.permute.xlu0 0
    %1013 = vperm.xlu0 %1012, %v1001
    %v1014 = vpop.permute.xlu0 %1013
    %v1016 = vadd.f32 %v1007, %v1014
    %v1017 = vadd.f32 %v1008, %v1014
    %v1018 = vadd.f32 %v1009, %v1014
    %v1019 = vadd.f32 %v1010, %v1014
    %v1024 = vrot.slane %v1017, 4
    %v1025 = vrot.slane %v1019, 4
    %vm1026 = vcmask 1043456
    %v1027 = vsel %vm1026, %v1016, %v1024
    %v1028 = vsel %vm1026, %v1018, %v1025
    %1031 = vst [vmem:[#allocation6] sm:$0xff] %v1027
    %1032 = vst [vmem:[#allocation6 + $0x8] sm:$0xff] %v1028
    // Predicated region
    $region18: #{tpu_custom_call.1} parent=1 // pred_check
      _
    $region19: #{tpu_custom_call.1} parent=1 // pred_check_branch
      %1034 = sbr.rel (0) target = $region21
    $region20: #{tpu_custom_call.1} parent=1 // pred_region
      %1036 = vsyncadd [#allocation5], 0
      %s1038 = sshll.u32 [#allocation6], 4
      %s1039 = int_to_ptr.vmem [resolvable:$true] %s1038
      %s1040 = sshll.u32 %s3, 4
      %s1041 = int_to_ptr.hbm [resolvable:$true] %s1040
      %1043 = dma.vmem_to_hbm [thread:$0]  %s1039, 256, %s1041, [#allocation5]
    $region21: #{tpu_custom_call.1} parent=1 // pred_fallthru
      _
    // Predicated region
    $region22: #{tpu_custom_call.1} parent=1 // pred_check
      _
    $region23: #{tpu_custom_call.1} parent=1 // pred_check_branch
      %1045 = sbr.rel (0) target = $region25
    $region24: #{tpu_custom_call.1} parent=1 // pred_region
      %1047 = dma.done [#allocation5], 256
    $region25: #{tpu_custom_call.1} parent=1 // pred_fallthru
      _
    %1048 = vsyncpa [#allocation4], 1
    %1049 = vsyncpa [#allocation5], 1

</llo_original>
